<compile_context>
chip_gen: v7x
topology: tpu7x:2x2x1
jax: 0.10.0
libtpu: 0.0.40
codegen_flags: <defaults>
</compile_context>

<pallas_src>
import math

import jax
import jax.numpy as jnp
import numpy as np
from jax.experimental import pallas as pl
from jax.experimental.pallas import tpu as pltpu


def _make_group_attention_kernel(inv_d_model):
    """Kernel factory: inv_d_model is the (compile-time) 1/256.0 score scale."""
    inv_dm = float(inv_d_model)

    def kernel(ctx_ref, prior_ref, gates_ref, dead_r_ref,
               wqk_ref, bqk_ref, gamma_ref, beta_ref,
               g_ref, nattn_ref):
        x = ctx_ref[0]                       # (S, D) float32
        S, D = x.shape

        # ---- LayerNorm (Tree-Transformer LN: unbiased std, eps added to std) ----
        mean = jnp.mean(x, axis=-1, keepdims=True)
        var = jnp.sum((x - mean) ** 2, axis=-1, keepdims=True) / (D - 1)
        ln = gamma_ref[...] * (x - mean) / (jnp.sqrt(var) + 1e-6) + beta_ref[...]

        # ---- fused Q|K projection: one MXU matmul, then lane slices ----
        qk = jnp.dot(ln, wqk_ref[...], preferred_element_type=jnp.float32,
                     precision=jax.lax.Precision.HIGHEST) + bqk_ref[...]
        q = qk[:, :D]                        # (S, D)
        k = qk[:, D:]                        # (S, D)

        # ---- neighbour keys via XLU rolls (np.roll semantics).  The wrapped
        #      boundary rows are always masked off by allow_dn / allow_up. ----
        k_prev = pltpu.roll(k, shift=1, axis=0)        # k_prev[i] = k[i-1]
        k_next = pltpu.roll(k, shift=S - 1, axis=0)    # k_next[i] = k[i+1]

        s_up = jnp.sum(q * k_next, axis=-1, keepdims=True) * inv_dm   # score (i, i+1)
        s_dn = jnp.sum(q * k_prev, axis=-1, keepdims=True) * inv_dm   # score (i, i-1)

        gates = gates_ref[0]                 # (S, 4): [allow_up, allow_dn, dead, prior_sup]
        allow_up = gates[:, 0:1] > 0.5
        allow_dn = gates[:, 1:2] > 0.5
        is_dead = gates[:, 2:3] > 0.5        # fully-masked row
        prior_sup = gates[:, 3:4]            # prior[i, i+1] (0-padded at i = S-1)

        # ---- 2-way masked softmax per row; matches the full-row softmax exactly:
        #      masked entries underflow to 0, fully-masked rows become uniform 1/S ----
        neg = jnp.float32(-1e9)
        su = jnp.where(allow_up, s_up, neg)
        sd = jnp.where(allow_dn, s_dn, neg)
        m = jnp.maximum(su, sd)
        e_up = jnp.where(allow_up, jnp.exp(su - m), 0.0)
        e_dn = jnp.where(allow_dn, jnp.exp(sd - m), 0.0)
        uni = jnp.float32(1.0 / S)
        denom = jnp.where(is_dead, 1.0, e_up + e_dn)
        up = jnp.where(is_dead, uni, e_up / denom)     # softmax value at (i, i+1)
        dn = jnp.where(is_dead, uni, e_dn / denom)     # softmax value at (i, i-1)

        # ---- sqrt(soft[i,j] * soft[j,i]) only on the O(S) non-trivial entries ----
        dn_next = pltpu.roll(dn, shift=S - 1, axis=0)  # dn[i+1]
        up_prev = pltpu.roll(up, shift=1, axis=0)      # up[i-1]
        sym_sup = jnp.sqrt(up * dn_next + 1e-9)        # (S,1): value at (i, i+1)
        sym_sub = jnp.sqrt(dn * up_prev + 1e-9)        # (S,1): value at (i, i-1)
        uni_sym = jnp.float32(math.sqrt(1.0 / (S * S) + 1e-9))   # both rows dead
        eps_sym = jnp.float32(math.sqrt(1e-9))                   # everywhere else

        row = jax.lax.broadcasted_iota(jnp.int32, (S, S), 0)
        col = jax.lax.broadcasted_iota(jnp.int32, (S, S), 1)
        is_diag = row == col
        is_sup = col == row + 1
        is_sub = col + 1 == row

        dead_r = dead_r_ref[0] > 0.5         # (1, S) bool
        dead_pair = jnp.logical_and(is_dead, dead_r)   # (S, S)

        sym = jnp.where(is_sup, sym_sup,
              jnp.where(is_sub, sym_sub,
              jnp.where(dead_pair, uni_sym, eps_sym)))
        prior = prior_ref[0]                 # (S, S)
        nattn = prior + (1.0 - prior) * sym
        nattn_ref[0] = nattn

        # ---- g_attn via exclusive prefix sums of log(superdiag(nattn)):
        #      off-diag g[i,j] = exp(C[max(i,j)] - C[min(i,j)]) + 1e-9, diag = nattn ----
        nsup = prior_sup + (1.0 - prior_sup) * sym_sup   # (S,1) superdiag of nattn
        logs = jnp.log(nsup + 1e-9)                      # (S,1); logs[S-1] never used
        c_row = jnp.sum(jnp.where(row < col, logs, 0.0), axis=0, keepdims=True)  # (1,S): C[j]
        c_col = jnp.sum(jnp.where(is_diag, c_row, 0.0), axis=1, keepdims=True)   # (S,1): C[i]
        g_log = jnp.where(col > row, c_row - c_col, c_col - c_row)   # C[max]-C[min] (<= ~0)
        g_off = jnp.exp(g_log) + 1e-9
        g_ref[0] = jnp.where(is_diag, nattn, g_off)

    return kernel


def group_attention(context, eos_mask, prior, wq, bq, wk, bk, gamma, beta,
                    *, d_model_scale=256.0):
    """Pallas wrapper.

    context (B,S,D) f32, eos_mask (B,1,S) int, prior (B,S,S) f32.
    Note: the PyTorch module hard-codes self.d_model = 256.0 for the score scale
    regardless of the constructor argument; d_model_scale documents/controls it.
    """
    B, S, D = context.shape
    f32 = jnp.float32
    context = context.astype(f32)
    prior = prior.astype(f32)

    # Fused Q|K projection weights (pre-transposed so the kernel does x @ W).
    wqk = jnp.concatenate([jnp.asarray(wq, f32).T, jnp.asarray(wk, f32).T], axis=1)   # (D, 2D)
    bqk = jnp.concatenate([jnp.asarray(bq, f32).reshape(1, D),
                           jnp.asarray(bk, f32).reshape(1, D)], axis=1)               # (1, 2D)
    gamma2 = jnp.asarray(gamma, f32).reshape(1, D)
    beta2 = jnp.asarray(beta, f32).reshape(1, D)

    # Tridiagonal gating vectors from eos, plus the superdiagonal of prior,
    # packed into one small per-row side input.
    eos = eos_mask[:, 0, :] != 0                                    # (B, S) bool
    zero_col = jnp.zeros((B, 1), dtype=bool)
    allow_up = jnp.concatenate([eos[:, 1:], zero_col], axis=1)      # eos[i+1], 0 at i=S-1
    allow_dn = jnp.concatenate([zero_col, eos[:, :-1]], axis=1)     # eos[i-1], 0 at i=0
    dead = jnp.logical_not(jnp.logical_or(allow_up, allow_dn))      # fully-masked rows
    prior_sup = jnp.pad(jnp.diagonal(prior, offset=1, axis1=1, axis2=2),
                        ((0, 0), (0, 1)))                            # (B, S), 0 at i=S-1
    gates = jnp.stack([allow_up.astype(f32), allow_dn.astype(f32),
                       dead.astype(f32), prior_sup.astype(f32)], axis=-1)   # (B, S, 4)
    dead_r = dead.astype(f32)[:, None, :]                           # (B, 1, S)

    kernel = _make_group_attention_kernel(1.0 / d_model_scale)

    grid_spec = pltpu.PrefetchScalarGridSpec(
        num_scalar_prefetch=0,
        grid=(B,),
        in_specs=[
            pl.BlockSpec((1, S, D), lambda b: (b, 0, 0)),   # context
            pl.BlockSpec((1, S, S), lambda b: (b, 0, 0)),   # prior
            pl.BlockSpec((1, S, 4), lambda b: (b, 0, 0)),   # packed gates + prior_sup
            pl.BlockSpec((1, 1, S), lambda b: (b, 0, 0)),   # dead (row layout)
            pl.BlockSpec((D, 2 * D), lambda b: (0, 0)),     # Wq^T | Wk^T
            pl.BlockSpec((1, 2 * D), lambda b: (0, 0)),     # bq | bk
            pl.BlockSpec((1, D), lambda b: (0, 0)),         # gamma
            pl.BlockSpec((1, D), lambda b: (0, 0)),         # beta
        ],
        out_specs=[
            pl.BlockSpec((1, S, S), lambda b: (b, 0, 0)),   # g_attn
            pl.BlockSpec((1, S, S), lambda b: (b, 0, 0)),   # neibor_attn
        ],
    )

    return pl.pallas_call(
        kernel,
        out_shape=(jax.ShapeDtypeStruct((B, S, S), f32),
                   jax.ShapeDtypeStruct((B, S, S), f32)),
        grid_spec=grid_spec,
        compiler_params=pltpu.CompilerParams(
            dimension_semantics=("parallel",),
            vmem_limit_bytes=48 * 1024 * 1024,
        ),
    )(context, prior, gates, dead_r, wqk, bqk, gamma2, beta2)


def group_attention_reference(context, eos_mask, prior, wq, bq, wk, bk, gamma, beta):
    """Pure-JAX reference matching the PyTorch forward semantics."""
    B, S, D = context.shape
    mean = context.mean(-1, keepdims=True)
    std = jnp.sqrt(jnp.sum((context - mean) ** 2, -1, keepdims=True) / (D - 1))
    ln = gamma * (context - mean) / (std + 1e-6) + beta

    a = jnp.eye(S, k=1, dtype=jnp.int32)
    b = jnp.eye(S, dtype=jnp.int32)
    c = jnp.eye(S, k=-1, dtype=jnp.int32)
    tri = jnp.triu(jnp.ones((S, S), jnp.float32))

    mask = eos_mask & (a + c)            # (B,1,S) & (S,S) -> (B,S,S)
    q = ln @ wq.T + bq
    k = ln @ wk.T + bk
    scores = q @ jnp.swapaxes(k, -1, -2) / 256.0
    scores = jnp.where(mask == 0, -1e9, scores)
    nattn = jax.nn.softmax(scores, axis=-1)
    nattn = jnp.sqrt(nattn * jnp.swapaxes(nattn, -1, -2) + 1e-9)
    nattn = prior + (1.0 - prior) * nattn
    t = jnp.where(a == 0, 0.0, jnp.log(nattn + 1e-9)) @ tri
    g = jnp.exp(tri @ t)
    g = jnp.where((tri.astype(jnp.int32) - b) == 0, 0.0, g)
    g = g + jnp.swapaxes(g, -1, -2) + jnp.where(b == 0, 1e-9, nattn)
    return g, nattn


if __name__ == "__main__":
    B, S, D = 2, 8, 32
    key = jax.random.PRNGKey(0)
    k_ctx, k_prior, k_wq, k_bq, k_wk, k_bk = jax.random.split(key, 6)

    context = jax.random.normal(k_ctx, (B, S, D), dtype=jnp.float32)
    prior = jax.random.uniform(k_prior, (B, S, S), dtype=jnp.float32)

    # Batch 0: no padding; batch 1: several masked positions (exercises the
    # dead-row / dead-pair uniform-softmax paths).
    eos_np = np.ones((B, 1, S), dtype=np.int32)
    eos_np[1, 0, 3::2] = 0
    eos_mask = jnp.asarray(eos_np)

    # Deterministic parameter init (Linear weights/biases, LayerNorm gamma/beta).
    bound = 1.0 / math.sqrt(D)
    wq = jax.random.uniform(k_wq, (D, D), jnp.float32, -bound, bound)
    bq = jax.random.uniform(k_bq, (D,), jnp.float32, -bound, bound)
    wk = jax.random.uniform(k_wk, (D, D), jnp.float32, -bound, bound)
    bk = jax.random.uniform(k_bk, (D,), jnp.float32, -bound, bound)
    gamma = jnp.ones((D,), jnp.float32)
    beta = jnp.zeros((D,), jnp.float32)

    g_attn, neibor_attn = group_attention(context, eos_mask, prior,
                                          wq, bq, wk, bk, gamma, beta)
    g_attn = jax.block_until_ready(g_attn)
    neibor_attn = jax.block_until_ready(neibor_attn)

    # Reference runs at per-call HIGHEST matmul precision (no global config mutation).
    with jax.default_matmul_precision("highest"):
        g_ref, n_ref = group_attention_reference(context, eos_mask, prior,
                                                 wq, bq, wk, bk, gamma, beta)
        g_ref = jax.block_until_ready(g_ref)
        n_ref = jax.block_until_ready(n_ref)

    np.testing.assert_allclose(np.asarray(neibor_attn), np.asarray(n_ref),
                               rtol=1e-3, atol=1e-5)
    np.testing.assert_allclose(np.asarray(g_attn), np.asarray(g_ref),
                               rtol=1e-3, atol=1e-5)
    print("KERNEL_OK")
</pallas_src>

<mosaic_0001>
module attributes {stable_mosaic.version = 11 : i64} {
  func.func @kernel(%arg0: i32, %arg1: memref<1x8x32xf32, #tpu.memory_space<vmem>>, %arg2: memref<1x8x8xf32, #tpu.memory_space<vmem>>, %arg3: memref<1x8x4xf32, #tpu.memory_space<vmem>>, %arg4: memref<1x1x8xf32, #tpu.memory_space<vmem>>, %arg5: memref<32x64xf32, #tpu.memory_space<vmem>>, %arg6: memref<1x64xf32, #tpu.memory_space<vmem>>, %arg7: memref<1x32xf32, #tpu.memory_space<vmem>>, %arg8: memref<1x32xf32, #tpu.memory_space<vmem>>, %arg9: memref<1x8x8xf32, #tpu.memory_space<vmem>>, %arg10: memref<1x8x8xf32, #tpu.memory_space<vmem>>) attributes {dimension_semantics = [#tpu.dimension_semantics<parallel>], iteration_bounds = array<i64: 2>, scalar_prefetch = 0 : i64, scratch_operands = 0 : i64, tpu.core_type = #tpu.core_type<tc>, window_params = [{transform_indices = @transform_0, window_bounds = array<i64: 1, 8, 32>}, {transform_indices = @transform_1, window_bounds = array<i64: 1, 8, 8>}, {transform_indices = @transform_2, window_bounds = array<i64: 1, 8, 4>}, {transform_indices = @transform_3, window_bounds = array<i64: 1, 1, 8>}, {pipeline_mode = #tpu.pipeline_mode<synchronous>, transform_indices = @transform_4, window_bounds = array<i64: 32, 64>}, {pipeline_mode = #tpu.pipeline_mode<synchronous>, transform_indices = @transform_5, window_bounds = array<i64: 1, 64>}, {pipeline_mode = #tpu.pipeline_mode<synchronous>, transform_indices = @transform_6, window_bounds = array<i64: 1, 32>}, {pipeline_mode = #tpu.pipeline_mode<synchronous>, transform_indices = @transform_7, window_bounds = array<i64: 1, 32>}, {transform_indices = @transform_8, window_bounds = array<i64: 1, 8, 8>}, {transform_indices = @transform_9, window_bounds = array<i64: 1, 8, 8>}]} {
    %c0 = arith.constant 0 : index
    %c0_0 = arith.constant 0 : index
    %c0_1 = arith.constant 0 : index
    %0 = vector.load %arg1[%c0, %c0_0, %c0_1] : memref<1x8x32xf32, #tpu.memory_space<vmem>>, vector<1x8x32xf32>
    %1 = vector.shape_cast %0 : vector<1x8x32xf32> to vector<8x32xf32>
    %cst = arith.constant dense<0.000000e+00> : vector<8xf32>
    %2 = vector.multi_reduction <add>, %1, %cst [1] : vector<8x32xf32> to vector<8xf32>
    %3 = vector.shape_cast %2 : vector<8xf32> to vector<8x1xf32>
    %cst_2 = arith.constant 3.200000e+01 : f32
    %4 = vector.broadcast %cst_2 : f32 to vector<8x1xf32>
    %5 = arith.divf %3, %4 : vector<8x1xf32>
    %6 = vector.broadcast %5 : vector<8x1xf32> to vector<8x32xf32>
    %7 = arith.subf %1, %6 : vector<8x32xf32>
    %8 = arith.mulf %7, %7 : vector<8x32xf32>
    %cst_3 = arith.constant dense<0.000000e+00> : vector<8xf32>
    %9 = vector.multi_reduction <add>, %8, %cst_3 [1] : vector<8x32xf32> to vector<8xf32>
    %10 = vector.shape_cast %9 : vector<8xf32> to vector<8x1xf32>
    %cst_4 = arith.constant 3.100000e+01 : f32
    %11 = vector.broadcast %cst_4 : f32 to vector<8x1xf32>
    %12 = arith.divf %10, %11 : vector<8x1xf32>
    %c0_5 = arith.constant 0 : index
    %c0_6 = arith.constant 0 : index
    %13 = vector.load %arg7[%c0_5, %c0_6] : memref<1x32xf32, #tpu.memory_space<vmem>>, vector<1x32xf32>
    %14 = vector.broadcast %5 : vector<8x1xf32> to vector<8x32xf32>
    %15 = arith.subf %1, %14 : vector<8x32xf32>
    %16 = vector.broadcast %13 : vector<1x32xf32> to vector<8x32xf32>
    %17 = arith.mulf %16, %15 : vector<8x32xf32>
    %18 = math.sqrt %12 : vector<8x1xf32>
    %cst_7 = arith.constant 9.99999997E-7 : f32
    %19 = vector.broadcast %cst_7 : f32 to vector<8x1xf32>
    %20 = arith.addf %18, %19 : vector<8x1xf32>
    %21 = vector.broadcast %20 : vector<8x1xf32> to vector<8x32xf32>
    %22 = arith.divf %17, %21 : vector<8x32xf32>
    %c0_8 = arith.constant 0 : index
    %c0_9 = arith.constant 0 : index
    %23 = vector.load %arg8[%c0_8, %c0_9] : memref<1x32xf32, #tpu.memory_space<vmem>>, vector<1x32xf32>
    %24 = vector.broadcast %23 : vector<1x32xf32> to vector<8x32xf32>
    %25 = arith.addf %22, %24 : vector<8x32xf32>
    %c0_10 = arith.constant 0 : index
    %c0_11 = arith.constant 0 : index
    %26 = vector.load %arg5[%c0_10, %c0_11] : memref<32x64xf32, #tpu.memory_space<vmem>>, vector<32x64xf32>
    %cst_12 = arith.constant dense<0.000000e+00> : vector<8x64xf32>
    %27 = tpu.matmul %25, %26, %cst_12 {dimension_numbers = #tpu.dot_dimension_numbers<[1], [0], [0], [1], [0, 0, 1, 1], [], []>, precision = #tpu.contract_precision<fp32>} : vector<8x32xf32>, vector<32x64xf32>, vector<8x64xf32> -> vector<8x64xf32>
    %c0_13 = arith.constant 0 : index
    %c0_14 = arith.constant 0 : index
    %28 = vector.load %arg6[%c0_13, %c0_14] : memref<1x64xf32, #tpu.memory_space<vmem>>, vector<1x64xf32>
    %29 = vector.broadcast %28 : vector<1x64xf32> to vector<8x64xf32>
    %30 = arith.addf %27, %29 : vector<8x64xf32>
    %31 = vector.extract_strided_slice %30 {offsets = [0, 0], sizes = [8, 32], strides = [1, 1]} : vector<8x64xf32> to vector<8x32xf32>
    %32 = vector.extract_strided_slice %30 {offsets = [0, 32], sizes = [8, 32], strides = [1, 1]} : vector<8x64xf32> to vector<8x32xf32>
    %c1_i32 = arith.constant 1 : i32
    %33 = tpu.dynamic_rotate %32 by %c1_i32 dim 0 : vector<8x32xf32>, i32 -> vector<8x32xf32>
    %c7_i32 = arith.constant 7 : i32
    %34 = tpu.dynamic_rotate %32 by %c7_i32 dim 0 : vector<8x32xf32>, i32 -> vector<8x32xf32>
    %35 = arith.mulf %31, %34 : vector<8x32xf32>
    %cst_15 = arith.constant dense<0.000000e+00> : vector<8xf32>
    %36 = vector.multi_reduction <add>, %35, %cst_15 [1] : vector<8x32xf32> to vector<8xf32>
    %37 = vector.shape_cast %36 : vector<8xf32> to vector<8x1xf32>
    %cst_16 = arith.constant 3.906250e-03 : f32
    %38 = vector.broadcast %cst_16 : f32 to vector<8x1xf32>
    %39 = arith.mulf %37, %38 : vector<8x1xf32>
    %40 = arith.mulf %31, %33 : vector<8x32xf32>
    %cst_17 = arith.constant dense<0.000000e+00> : vector<8xf32>
    %41 = vector.multi_reduction <add>, %40, %cst_17 [1] : vector<8x32xf32> to vector<8xf32>
    %42 = vector.shape_cast %41 : vector<8xf32> to vector<8x1xf32>
    %cst_18 = arith.constant 3.906250e-03 : f32
    %43 = vector.broadcast %cst_18 : f32 to vector<8x1xf32>
    %44 = arith.mulf %42, %43 : vector<8x1xf32>
    %c0_19 = arith.constant 0 : index
    %c0_20 = arith.constant 0 : index
    %c0_21 = arith.constant 0 : index
    %45 = vector.load %arg3[%c0_19, %c0_20, %c0_21] : memref<1x8x4xf32, #tpu.memory_space<vmem>>, vector<1x8x4xf32>
    %46 = vector.shape_cast %45 : vector<1x8x4xf32> to vector<8x4xf32>
    %47 = vector.extract_strided_slice %46 {offsets = [0, 0], sizes = [8, 1], strides = [1, 1]} : vector<8x4xf32> to vector<8x1xf32>
    %cst_22 = arith.constant 5.000000e-01 : f32
    %48 = vector.broadcast %cst_22 : f32 to vector<8x1xf32>
    %49 = arith.cmpf ogt, %47, %48 : vector<8x1xf32>
    %50 = vector.extract_strided_slice %46 {offsets = [0, 1], sizes = [8, 1], strides = [1, 1]} : vector<8x4xf32> to vector<8x1xf32>
    %cst_23 = arith.constant 5.000000e-01 : f32
    %51 = vector.broadcast %cst_23 : f32 to vector<8x1xf32>
    %52 = arith.cmpf ogt, %50, %51 : vector<8x1xf32>
    %53 = vector.extract_strided_slice %46 {offsets = [0, 2], sizes = [8, 1], strides = [1, 1]} : vector<8x4xf32> to vector<8x1xf32>
    %cst_24 = arith.constant 5.000000e-01 : f32
    %54 = vector.broadcast %cst_24 : f32 to vector<8x1xf32>
    %55 = arith.cmpf ogt, %53, %54 : vector<8x1xf32>
    %56 = vector.extract_strided_slice %46 {offsets = [0, 3], sizes = [8, 1], strides = [1, 1]} : vector<8x4xf32> to vector<8x1xf32>
    %cst_25 = arith.constant -1.000000e+09 : f32
    %57 = vector.broadcast %cst_25 : f32 to vector<8x1xf32>
    %58 = arith.select %49, %39, %57 : vector<8x1xi1>, vector<8x1xf32>
    %cst_26 = arith.constant -1.000000e+09 : f32
    %59 = vector.broadcast %cst_26 : f32 to vector<8x1xf32>
    %60 = arith.select %52, %44, %59 : vector<8x1xi1>, vector<8x1xf32>
    %61 = arith.maximumf %58, %60 : vector<8x1xf32>
    %62 = arith.subf %58, %61 : vector<8x1xf32>
    %63 = math.exp %62 : vector<8x1xf32>
    %cst_27 = arith.constant 0.000000e+00 : f32
    %64 = vector.broadcast %cst_27 : f32 to vector<8x1xf32>
    %65 = arith.select %49, %63, %64 : vector<8x1xi1>, vector<8x1xf32>
    %66 = arith.subf %60, %61 : vector<8x1xf32>
    %67 = math.exp %66 : vector<8x1xf32>
    %cst_28 = arith.constant 0.000000e+00 : f32
    %68 = vector.broadcast %cst_28 : f32 to vector<8x1xf32>
    %69 = arith.select %52, %67, %68 : vector<8x1xi1>, vector<8x1xf32>
    %70 = arith.addf %65, %69 : vector<8x1xf32>
    %cst_29 = arith.constant 1.000000e+00 : f32
    %71 = vector.broadcast %cst_29 : f32 to vector<8x1xf32>
    %72 = arith.select %55, %71, %70 : vector<8x1xi1>, vector<8x1xf32>
    %73 = arith.divf %65, %72 : vector<8x1xf32>
    %cst_30 = arith.constant 1.250000e-01 : f32
    %74 = vector.broadcast %cst_30 : f32 to vector<8x1xf32>
    %75 = arith.select %55, %74, %73 : vector<8x1xi1>, vector<8x1xf32>
    %76 = arith.divf %69, %72 : vector<8x1xf32>
    %cst_31 = arith.constant 1.250000e-01 : f32
    %77 = vector.broadcast %cst_31 : f32 to vector<8x1xf32>
    %78 = arith.select %55, %77, %76 : vector<8x1xi1>, vector<8x1xf32>
    %c7_i32_32 = arith.constant 7 : i32
    %79 = tpu.dynamic_rotate %78 by %c7_i32_32 dim 0 : vector<8x1xf32>, i32 -> vector<8x1xf32>
    %c1_i32_33 = arith.constant 1 : i32
    %80 = tpu.dynamic_rotate %75 by %c1_i32_33 dim 0 : vector<8x1xf32>, i32 -> vector<8x1xf32>
    %81 = arith.mulf %75, %79 : vector<8x1xf32>
    %cst_34 = arith.constant 9.99999971E-10 : f32
    %82 = vector.broadcast %cst_34 : f32 to vector<8x1xf32>
    %83 = arith.addf %81, %82 : vector<8x1xf32>
    %84 = math.sqrt %83 : vector<8x1xf32>
    %85 = arith.mulf %78, %80 : vector<8x1xf32>
    %cst_35 = arith.constant 9.99999971E-10 : f32
    %86 = vector.broadcast %cst_35 : f32 to vector<8x1xf32>
    %87 = arith.addf %85, %86 : vector<8x1xf32>
    %88 = math.sqrt %87 : vector<8x1xf32>
    %89 = tpu.iota {dimensions = array<i32: 0>} : vector<8x8xi32>
    %90 = tpu.iota {dimensions = array<i32: 1>} : vector<8x8xi32>
    %91 = arith.cmpi eq, %89, %90 : vector<8x8xi32>
    %c1_i32_36 = arith.constant 1 : i32
    %92 = vector.broadcast %c1_i32_36 : i32 to vector<8x8xi32>
    %93 = arith.addi %89, %92 : vector<8x8xi32>
    %94 = arith.cmpi eq, %90, %93 : vector<8x8xi32>
    %c1_i32_37 = arith.constant 1 : i32
    %95 = vector.broadcast %c1_i32_37 : i32 to vector<8x8xi32>
    %96 = arith.addi %90, %95 : vector<8x8xi32>
    %97 = arith.cmpi eq, %96, %89 : vector<8x8xi32>
    %c0_38 = arith.constant 0 : index
    %c0_39 = arith.constant 0 : index
    %c0_40 = arith.constant 0 : index
    %98 = vector.load %arg4[%c0_38, %c0_39, %c0_40] : memref<1x1x8xf32, #tpu.memory_space<vmem>>, vector<1x1x8xf32>
    %99 = vector.shape_cast %98 : vector<1x1x8xf32> to vector<1x8xf32>
    %cst_41 = arith.constant 5.000000e-01 : f32
    %100 = vector.broadcast %cst_41 : f32 to vector<1x8xf32>
    %101 = arith.cmpf ogt, %99, %100 : vector<1x8xf32>
    %102 = vector.broadcast %55 : vector<8x1xi1> to vector<8x8xi1>
    %103 = vector.broadcast %101 : vector<1x8xi1> to vector<8x8xi1>
    %104 = arith.andi %102, %103 : vector<8x8xi1>
    %cst_42 = arith.constant 1.250000e-01 : f32
    %cst_43 = arith.constant 3.16227779E-5 : f32
    %105 = vector.broadcast %cst_42 : f32 to vector<8x8xf32>
    %106 = vector.broadcast %cst_43 : f32 to vector<8x8xf32>
    %107 = arith.select %104, %105, %106 : vector<8x8xi1>, vector<8x8xf32>
    %108 = vector.shape_cast %88 : vector<8x1xf32> to vector<8x1xf32>
    %109 = vector.broadcast %108 : vector<8x1xf32> to vector<8x8xf32>
    %110 = arith.select %97, %109, %107 : vector<8x8xi1>, vector<8x8xf32>
    %111 = vector.shape_cast %84 : vector<8x1xf32> to vector<8x1xf32>
    %112 = vector.broadcast %111 : vector<8x1xf32> to vector<8x8xf32>
    %113 = arith.select %94, %112, %110 : vector<8x8xi1>, vector<8x8xf32>
    %c0_44 = arith.constant 0 : index
    %c0_45 = arith.constant 0 : index
    %c0_46 = arith.constant 0 : index
    %114 = vector.load %arg2[%c0_44, %c0_45, %c0_46] : memref<1x8x8xf32, #tpu.memory_space<vmem>>, vector<1x8x8xf32>
    %115 = vector.shape_cast %114 : vector<1x8x8xf32> to vector<8x8xf32>
    %cst_47 = arith.constant 1.000000e+00 : f32
    %116 = vector.broadcast %cst_47 : f32 to vector<8x8xf32>
    %117 = arith.subf %116, %115 : vector<8x8xf32>
    %118 = arith.mulf %117, %113 : vector<8x8xf32>
    %119 = arith.addf %115, %118 : vector<8x8xf32>
    %c0_48 = arith.constant 0 : index
    %c0_49 = arith.constant 0 : index
    %c0_50 = arith.constant 0 : index
    %120 = vector.load %arg10[%c0_48, %c0_49, %c0_50] : memref<1x8x8xf32, #tpu.memory_space<vmem>>, vector<1x8x8xf32>
    %121 = vector.shape_cast %120 : vector<1x8x8xf32> to vector<8x8xf32>
    %122 = vector.shape_cast %119 : vector<8x8xf32> to vector<1x8x8xf32>
    tpu.vector_store %arg10[%c0_48, %c0_49, %c0_50], %122 {strides = array<i32>} : memref<1x8x8xf32, #tpu.memory_space<vmem>>, vector<1x8x8xf32>,
    %cst_51 = arith.constant 1.000000e+00 : f32
    %123 = vector.broadcast %cst_51 : f32 to vector<8x1xf32>
    %124 = arith.subf %123, %56 : vector<8x1xf32>
    %125 = arith.mulf %124, %84 : vector<8x1xf32>
    %126 = arith.addf %56, %125 : vector<8x1xf32>
    %cst_52 = arith.constant 9.99999971E-10 : f32
    %127 = vector.broadcast %cst_52 : f32 to vector<8x1xf32>
    %128 = arith.addf %126, %127 : vector<8x1xf32>
    %129 = math.log %128 : vector<8x1xf32>
    %130 = arith.cmpi slt, %89, %90 : vector<8x8xi32>
    %cst_53 = arith.constant 0.000000e+00 : f32
    %131 = vector.shape_cast %129 : vector<8x1xf32> to vector<8x1xf32>
    %132 = vector.broadcast %131 : vector<8x1xf32> to vector<8x8xf32>
    %133 = vector.broadcast %cst_53 : f32 to vector<8x8xf32>
    %134 = arith.select %130, %132, %133 : vector<8x8xi1>, vector<8x8xf32>
    %cst_54 = arith.constant dense<0.000000e+00> : vector<8xf32>
    %135 = vector.multi_reduction <add>, %134, %cst_54 [0] : vector<8x8xf32> to vector<8xf32>
    %136 = vector.shape_cast %135 : vector<8xf32> to vector<1x8xf32>
    %cst_55 = arith.constant 0.000000e+00 : f32
    %137 = vector.shape_cast %136 : vector<1x8xf32> to vector<1x8xf32>
    %138 = vector.broadcast %137 : vector<1x8xf32> to vector<8x8xf32>
    %139 = vector.broadcast %cst_55 : f32 to vector<8x8xf32>
    %140 = arith.select %91, %138, %139 : vector<8x8xi1>, vector<8x8xf32>
    %cst_56 = arith.constant dense<0.000000e+00> : vector<8xf32>
    %141 = vector.multi_reduction <add>, %140, %cst_56 [1] : vector<8x8xf32> to vector<8xf32>
    %142 = vector.shape_cast %141 : vector<8xf32> to vector<8x1xf32>
    %143 = arith.cmpi sgt, %90, %89 : vector<8x8xi32>
    %144 = vector.broadcast %136 : vector<1x8xf32> to vector<8x8xf32>
    %145 = vector.broadcast %142 : vector<8x1xf32> to vector<8x8xf32>
    %146 = arith.subf %144, %145 : vector<8x8xf32>
    %147 = vector.broadcast %142 : vector<8x1xf32> to vector<8x8xf32>
    %148 = vector.broadcast %136 : vector<1x8xf32> to vector<8x8xf32>
    %149 = arith.subf %147, %148 : vector<8x8xf32>
    %150 = arith.select %143, %146, %149 : vector<8x8xi1>, vector<8x8xf32>
    %151 = math.exp %150 : vector<8x8xf32>
    %cst_57 = arith.constant 9.99999971E-10 : f32
    %152 = vector.broadcast %cst_57 : f32 to vector<8x8xf32>
    %153 = arith.addf %151, %152 : vector<8x8xf32>
    %154 = arith.select %91, %119, %153 : vector<8x8xi1>, vector<8x8xf32>
    %c0_58 = arith.constant 0 : index
    %c0_59 = arith.constant 0 : index
    %c0_60 = arith.constant 0 : index
    %155 = vector.load %arg9[%c0_58, %c0_59, %c0_60] : memref<1x8x8xf32, #tpu.memory_space<vmem>>, vector<1x8x8xf32>
    %156 = vector.shape_cast %155 : vector<1x8x8xf32> to vector<8x8xf32>
    %157 = vector.shape_cast %154 : vector<8x8xf32> to vector<1x8x8xf32>
    tpu.vector_store %arg9[%c0_58, %c0_59, %c0_60], %157 {strides = array<i32>} : memref<1x8x8xf32, #tpu.memory_space<vmem>>, vector<1x8x8xf32>,
    return
  }
  func.func @transform_0(%arg0: i32) -> (i32, i32, i32) {
    %c0_i32 = arith.constant 0 : i32
    %c0_i32_0 = arith.constant 0 : i32
    %c0_i32_1 = arith.constant 0 : i32
    return %arg0, %c0_i32, %c0_i32_0 : i32, i32, i32
  }
  func.func @transform_1(%arg0: i32) -> (i32, i32, i32) {
    %c0_i32 = arith.constant 0 : i32
    %c0_i32_0 = arith.constant 0 : i32
    %c0_i32_1 = arith.constant 0 : i32
    return %arg0, %c0_i32, %c0_i32_0 : i32, i32, i32
  }
  func.func @transform_2(%arg0: i32) -> (i32, i32, i32) {
    %c0_i32 = arith.constant 0 : i32
    %c0_i32_0 = arith.constant 0 : i32
    %c0_i32_1 = arith.constant 0 : i32
    return %arg0, %c0_i32, %c0_i32_0 : i32, i32, i32
  }
  func.func @transform_3(%arg0: i32) -> (i32, i32, i32) {
    %c0_i32 = arith.constant 0 : i32
    %c0_i32_0 = arith.constant 0 : i32
    %c0_i32_1 = arith.constant 0 : i32
    return %arg0, %c0_i32, %c0_i32_0 : i32, i32, i32
  }
  func.func @transform_4(%arg0: i32) -> (i32, i32) {
    %c0_i32 = arith.constant 0 : i32
    %c0_i32_0 = arith.constant 0 : i32
    %c0_i32_1 = arith.constant 0 : i32
    return %c0_i32, %c0_i32_0 : i32, i32
  }
  func.func @transform_5(%arg0: i32) -> (i32, i32) {
    %c0_i32 = arith.constant 0 : i32
    %c0_i32_0 = arith.constant 0 : i32
    %c0_i32_1 = arith.constant 0 : i32
    return %c0_i32, %c0_i32_0 : i32, i32
  }
  func.func @transform_6(%arg0: i32) -> (i32, i32) {
    %c0_i32 = arith.constant 0 : i32
    %c0_i32_0 = arith.constant 0 : i32
    %c0_i32_1 = arith.constant 0 : i32
    return %c0_i32, %c0_i32_0 : i32, i32
  }
  func.func @transform_7(%arg0: i32) -> (i32, i32) {
    %c0_i32 = arith.constant 0 : i32
    %c0_i32_0 = arith.constant 0 : i32
    %c0_i32_1 = arith.constant 0 : i32
    return %c0_i32, %c0_i32_0 : i32, i32
  }
  func.func @transform_8(%arg0: i32) -> (i32, i32, i32) {
    %c0_i32 = arith.constant 0 : i32
    %c0_i32_0 = arith.constant 0 : i32
    %c0_i32_1 = arith.constant 0 : i32
    return %arg0, %c0_i32, %c0_i32_0 : i32, i32, i32
  }
  func.func @transform_9(%arg0: i32) -> (i32, i32, i32) {
    %c0_i32 = arith.constant 0 : i32
    %c0_i32_0 = arith.constant 0 : i32
    %c0_i32_1 = arith.constant 0 : i32
    return %arg0, %c0_i32, %c0_i32_0 : i32, i32, i32
  }
}

</mosaic_0001>

<llo_original>
// kernel: tpu_custom_call.1
$region0: #{tpu_custom_call.1}
  #allocation0 [shape = 'u32[]', space=smem, size = 0x4, offset = 0x4, fixed_abs, tag = 'smem constant byte address 0x4 - core index']
  #allocation1 [shape = 'u32[144,128]{1,0:T(1,128)}', space=vmem, size = 0x12000, scoped, tag = 'internal scratch']
  %s0 = inlined_call_operand.hbm [shape: f32[2,8,32], index: 0, kind: input, shape index: {}]
  %s1 = inlined_call_operand.hbm [shape: f32[2,8,8], index: 1, kind: input, shape index: {}]
  %s2 = inlined_call_operand.vmem [shape: f32[2,8,4], index: 2, kind: input, shape index: {}]
  %s3 = inlined_call_operand.vmem [shape: f32[2,1,8], index: 3, kind: input, shape index: {}]
  %s4 = inlined_call_operand.vmem [shape: f32[32,64], index: 4, kind: input, shape index: {}]
  %s5 = inlined_call_operand.vmem [shape: f32[1,64], index: 5, kind: input, shape index: {}]
  %s6 = inlined_call_operand.vmem [shape: f32[1,32], index: 6, kind: input, shape index: {}]
  %s7 = inlined_call_operand.vmem [shape: f32[1,32], index: 7, kind: input, shape index: {}]
  %s8 = inlined_call_operand.hbm [shape: f32[2,8,8], index: 8, kind: output, shape index: {0}]
  %s9 = inlined_call_operand.hbm [shape: f32[2,8,8], index: 9, kind: output, shape index: {1}]
  %10 = xla_tuple %s8, %s9
  %s11 = sld [smem:[#allocation0]]
  $region81: #{tpu_custom_call.1} parent=0
    _
  %s13 = ssub.s32 1, %s11
  %s14 = scalar_select 0, %s13, %s11
  $region1: #{tpu_custom_call.1} parent=0
    #allocation2 [shape = 'u8[8192]{0}', space=vmem, size = 0x2000, scoped, tag = 'input window, operand 0']
    #allocation3 [shape = 's32[2]{0}', space=sflag, size = 0x8, scoped, tag = 'scoped memory for tpu_custom_call.1']
    #allocation4 [shape = 's32[2]{0}', space=sflag, size = 0x8, scoped, tag = 'scoped memory for tpu_custom_call.1']
    #allocation5 [shape = 'u8[8192]{0}', space=vmem, size = 0x2000, scoped, tag = 'input window, operand 1']
    #allocation6 [shape = 's32[2]{0}', space=sflag, size = 0x8, scoped, tag = 'scoped memory for tpu_custom_call.1']
    #allocation7 [shape = 'u8[8192]{0}', space=vmem, size = 0x2000, scoped, tag = 'output window, operand 0']
    #allocation8 [shape = 'u8[8192]{0}', space=vmem, size = 0x2000, scoped, tag = 'output window, operand 1']
    #allocation9 [shape = 's32[2]{0}', space=sflag, size = 0x8, scoped, tag = 'scoped memory for tpu_custom_call.1']
    %15 = vsyncpa [#allocation3], 0
    %s16 = scalar_lea.sflag [#allocation3], 1
    %17 = vsyncpa %s16, 0
    %18 = vsyncpa [#allocation6], 0
    %s19 = scalar_lea.sflag [#allocation6], 1
    %20 = vsyncpa %s19, 0
    %21 = vsyncpa [#allocation4], 0
    %s22 = scalar_lea.sflag [#allocation4], 1
    %23 = vsyncpa %s22, 0
    %24 = vsyncpa [#allocation9], 0
    %s25 = scalar_lea.sflag [#allocation9], 1
    %26 = vsyncpa %s25, 0
    loop: start=0, step=1, limit=4
    $region2: #{tpu_custom_call.1} parent=1 // loop_pre_header
      _
    $region3: #{tpu_custom_call.1} parent=1 // loop_header
      %s28 = sphi 0, %s32
      %p29 = scmp.ge.s32.totalorder %s28, 4
      %s38 = sphi 0, %s40
      %s41 = sphi 0, %s38
      %s42 = sphi 0, %s41
      %s58 = sphi 0, %s42
      %s64 = sphi 0, %s66
      %s67 = sphi 0, %s64
      %s68 = sphi 0, %s67
      %s84 = sphi 0, %s68
      %s90 = sphi 0, %s92
      %s93 = sphi 0, %s90
      %s94 = sphi 0, %s93
      %s110 = sphi 0, %s94
      %s116 = sphi 0, %s118
      %s119 = sphi 0, %s116
      %s120 = sphi 0, %s119
      %s136 = sphi 0, %s120
      %s140 = sphi 0, %s140
      %s142 = sphi 0, %s140
      %s143 = sphi 0, %s142
      %s157 = sphi 0, %s143
      %s161 = sphi 0, %s161
      %s163 = sphi 0, %s161
      %s164 = sphi 0, %s163
      %s178 = sphi 0, %s164
      %s182 = sphi 0, %s182
      %s184 = sphi 0, %s182
      %s185 = sphi 0, %s184
      %s199 = sphi 0, %s185
      %s203 = sphi 0, %s203
      %s205 = sphi 0, %s203
      %s206 = sphi 0, %s205
      %s220 = sphi 0, %s206
      %s226 = sphi 0, %s228
      %s229 = sphi 0, %s226
      %s230 = sphi 0, %s229
      %s246 = sphi 0, %s230
      %s252 = sphi 0, %s254
      %s255 = sphi 0, %s252
      %s256 = sphi 0, %s255
      %s272 = sphi 0, %s256
    $region4: #{tpu_custom_call.1} parent=1 // loop_header_branch
      %31 = sbr.rel (%p29) target = $region8
    $region5: #{tpu_custom_call.1} parent=1 // loop_body
      %s33 = ssub.s32 %s28, 1
      %s34 = ssub.s32 %s28, 2
      %s35 = sadd.s32 %s28, 1
      %s36 = ssub.s32 %s28, %s35
      %p37 = scmp.eq.s32.totalorder %s36, 0
      %s39 = sadd.s32 %s38, 1
      %s40 = scalar_select %p37, %s38, %s39
      %p43 = pneg %p37
      %p44 = scmp.eq.s32.totalorder %s28, 1
      %p45 = por %p43, %p44
      %p46 = scmp.ne.s32.totalorder %s38, %s41
      %p47 = scmp.eq.s32.totalorder %s28, 0
      %p48 = por %p46, %p47
      %p49 = scmp.ne.s32.totalorder %s38, %s41
      %p50 = scmp.eq.s32.totalorder %s33, 1
      %p51 = por %p49, %p50
      %p52 = scmp.ne.s32.totalorder %s41, %s42
      %p53 = scmp.eq.s32.totalorder %s33, 0
      %p54 = por %p52, %p53
      %p55 = scmp.ne.s32.totalorder %s41, %s42
      %p56 = scmp.eq.s32.totalorder %s34, 1
      %p57 = por %p55, %p56
      %p59 = scmp.ne.s32.totalorder %s42, %s58
      %p60 = scmp.eq.s32.totalorder %s34, 0
      %p61 = por %p59, %p60
      %s62 = ssub.s32 %s28, %s35
      %p63 = scmp.eq.s32.totalorder %s62, 0
      %s65 = sadd.s32 %s64, 1
      %s66 = scalar_select %p63, %s64, %s65
      %p69 = pneg %p63
      %p70 = scmp.eq.s32.totalorder %s28, 1
      %p71 = por %p69, %p70
      %p72 = scmp.ne.s32.totalorder %s64, %s67
      %p73 = scmp.eq.s32.totalorder %s28, 0
      %p74 = por %p72, %p73
      %p75 = scmp.ne.s32.totalorder %s64, %s67
      %p76 = scmp.eq.s32.totalorder %s33, 1
      %p77 = por %p75, %p76
      %p78 = scmp.ne.s32.totalorder %s67, %s68
      %p79 = scmp.eq.s32.totalorder %s33, 0
      %p80 = por %p78, %p79
      %p81 = scmp.ne.s32.totalorder %s67, %s68
      %p82 = scmp.eq.s32.totalorder %s34, 1
      %p83 = por %p81, %p82
      %p85 = scmp.ne.s32.totalorder %s68, %s84
      %p86 = scmp.eq.s32.totalorder %s34, 0
      %p87 = por %p85, %p86
      %s88 = ssub.s32 %s28, %s35
      %p89 = scmp.eq.s32.totalorder %s88, 0
      %s91 = sadd.s32 %s90, 1
      %s92 = scalar_select %p89, %s90, %s91
      %p95 = pneg %p89
      %p96 = scmp.eq.s32.totalorder %s28, 1
      %p97 = por %p95, %p96
      %p98 = scmp.ne.s32.totalorder %s90, %s93
      %p99 = scmp.eq.s32.totalorder %s28, 0
      %p100 = por %p98, %p99
      %p101 = scmp.ne.s32.totalorder %s90, %s93
      %p102 = scmp.eq.s32.totalorder %s33, 1
      %p103 = por %p101, %p102
      %p104 = scmp.ne.s32.totalorder %s93, %s94
      %p105 = scmp.eq.s32.totalorder %s33, 0
      %p106 = por %p104, %p105
      %p107 = scmp.ne.s32.totalorder %s93, %s94
      %p108 = scmp.eq.s32.totalorder %s34, 1
      %p109 = por %p107, %p108
      %p111 = scmp.ne.s32.totalorder %s94, %s110
      %p112 = scmp.eq.s32.totalorder %s34, 0
      %p113 = por %p111, %p112
      %s114 = ssub.s32 %s28, %s35
      %p115 = scmp.eq.s32.totalorder %s114, 0
      %s117 = sadd.s32 %s116, 1
      %s118 = scalar_select %p115, %s116, %s117
      %p121 = pneg %p115
      %p122 = scmp.eq.s32.totalorder %s28, 1
      %p123 = por %p121, %p122
      %p124 = scmp.ne.s32.totalorder %s116, %s119
      %p125 = scmp.eq.s32.totalorder %s28, 0
      %p126 = por %p124, %p125
      %p127 = scmp.ne.s32.totalorder %s116, %s119
      %p128 = scmp.eq.s32.totalorder %s33, 1
      %p129 = por %p127, %p128
      %p130 = scmp.ne.s32.totalorder %s119, %s120
      %p131 = scmp.eq.s32.totalorder %s33, 0
      %p132 = por %p130, %p131
      %p133 = scmp.ne.s32.totalorder %s119, %s120
      %p134 = scmp.eq.s32.totalorder %s34, 1
      %p135 = por %p133, %p134
      %p137 = scmp.ne.s32.totalorder %s120, %s136
      %p138 = scmp.eq.s32.totalorder %s34, 0
      %p139 = por %p137, %p138
      %s141 = sadd.s32 %s140, 1
      %p144 = scmp.eq.s32.totalorder %s28, 1
      %p145 = scmp.ne.s32.totalorder %s140, %s142
      %p146 = scmp.eq.s32.totalorder %s28, 0
      %p147 = por %p145, %p146
      %p148 = scmp.ne.s32.totalorder %s140, %s142
      %p149 = scmp.eq.s32.totalorder %s33, 1
      %p150 = por %p148, %p149
      %p151 = scmp.ne.s32.totalorder %s142, %s143
      %p152 = scmp.eq.s32.totalorder %s33, 0
      %p153 = por %p151, %p152
      %p154 = scmp.ne.s32.totalorder %s142, %s143
      %p155 = scmp.eq.s32.totalorder %s34, 1
      %p156 = por %p154, %p155
      %p158 = scmp.ne.s32.totalorder %s143, %s157
      %p159 = scmp.eq.s32.totalorder %s34, 0
      %p160 = por %p158, %p159
      %s162 = sadd.s32 %s161, 1
      %p165 = scmp.eq.s32.totalorder %s28, 1
      %p166 = scmp.ne.s32.totalorder %s161, %s163
      %p167 = scmp.eq.s32.totalorder %s28, 0
      %p168 = por %p166, %p167
      %p169 = scmp.ne.s32.totalorder %s161, %s163
      %p170 = scmp.eq.s32.totalorder %s33, 1
      %p171 = por %p169, %p170
      %p172 = scmp.ne.s32.totalorder %s163, %s164
      %p173 = scmp.eq.s32.totalorder %s33, 0
      %p174 = por %p172, %p173
      %p175 = scmp.ne.s32.totalorder %s163, %s164
      %p176 = scmp.eq.s32.totalorder %s34, 1
      %p177 = por %p175, %p176
      %p179 = scmp.ne.s32.totalorder %s164, %s178
      %p180 = scmp.eq.s32.totalorder %s34, 0
      %p181 = por %p179, %p180
      %s183 = sadd.s32 %s182, 1
      %p186 = scmp.eq.s32.totalorder %s28, 1
      %p187 = scmp.ne.s32.totalorder %s182, %s184
      %p188 = scmp.eq.s32.totalorder %s28, 0
      %p189 = por %p187, %p188
      %p190 = scmp.ne.s32.totalorder %s182, %s184
      %p191 = scmp.eq.s32.totalorder %s33, 1
      %p192 = por %p190, %p191
      %p193 = scmp.ne.s32.totalorder %s184, %s185
      %p194 = scmp.eq.s32.totalorder %s33, 0
      %p195 = por %p193, %p194
      %p196 = scmp.ne.s32.totalorder %s184, %s185
      %p197 = scmp.eq.s32.totalorder %s34, 1
      %p198 = por %p196, %p197
      %p200 = scmp.ne.s32.totalorder %s185, %s199
      %p201 = scmp.eq.s32.totalorder %s34, 0
      %p202 = por %p200, %p201
      %s204 = sadd.s32 %s203, 1
      %p207 = scmp.eq.s32.totalorder %s28, 1
      %p208 = scmp.ne.s32.totalorder %s203, %s205
      %p209 = scmp.eq.s32.totalorder %s28, 0
      %p210 = por %p208, %p209
      %p211 = scmp.ne.s32.totalorder %s203, %s205
      %p212 = scmp.eq.s32.totalorder %s33, 1
      %p213 = por %p211, %p212
      %p214 = scmp.ne.s32.totalorder %s205, %s206
      %p215 = scmp.eq.s32.totalorder %s33, 0
      %p216 = por %p214, %p215
      %p217 = scmp.ne.s32.totalorder %s205, %s206
      %p218 = scmp.eq.s32.totalorder %s34, 1
      %p219 = por %p217, %p218
      %p221 = scmp.ne.s32.totalorder %s206, %s220
      %p222 = scmp.eq.s32.totalorder %s34, 0
      %p223 = por %p221, %p222
      %s224 = ssub.s32 %s28, %s35
      %p225 = scmp.eq.s32.totalorder %s224, 0
      %s227 = sadd.s32 %s226, 1
      %s228 = scalar_select %p225, %s226, %s227
      %p231 = pneg %p225
      %p232 = scmp.eq.s32.totalorder %s28, 1
      %p233 = por %p231, %p232
      %p234 = scmp.ne.s32.totalorder %s226, %s229
      %p235 = scmp.eq.s32.totalorder %s28, 0
      %p236 = por %p234, %p235
      %p237 = scmp.ne.s32.totalorder %s226, %s229
      %p238 = scmp.eq.s32.totalorder %s33, 1
      %p239 = por %p237, %p238
      %p240 = scmp.ne.s32.totalorder %s229, %s230
      %p241 = scmp.eq.s32.totalorder %s33, 0
      %p242 = por %p240, %p241
      %p243 = scmp.ne.s32.totalorder %s229, %s230
      %p244 = scmp.eq.s32.totalorder %s34, 1
      %p245 = por %p243, %p244
      %p247 = scmp.ne.s32.totalorder %s230, %s246
      %p248 = scmp.eq.s32.totalorder %s34, 0
      %p249 = por %p247, %p248
      %s250 = ssub.s32 %s28, %s35
      %p251 = scmp.eq.s32.totalorder %s250, 0
      %s253 = sadd.s32 %s252, 1
      %s254 = scalar_select %p251, %s252, %s253
      %p257 = pneg %p251
      %p258 = scmp.eq.s32.totalorder %s28, 1
      %p259 = por %p257, %p258
      %p260 = scmp.ne.s32.totalorder %s252, %s255
      %p261 = scmp.eq.s32.totalorder %s28, 0
      %p262 = por %p260, %p261
      %p263 = scmp.ne.s32.totalorder %s252, %s255
      %p264 = scmp.eq.s32.totalorder %s33, 1
      %p265 = por %p263, %p264
      %p266 = scmp.ne.s32.totalorder %s255, %s256
      %p267 = scmp.eq.s32.totalorder %s33, 0
      %p268 = por %p266, %p267
      %p269 = scmp.ne.s32.totalorder %s255, %s256
      %p270 = scmp.eq.s32.totalorder %s34, 1
      %p271 = por %p269, %p270
      %p273 = scmp.ne.s32.totalorder %s256, %s272
      %p274 = scmp.eq.s32.totalorder %s34, 0
      %p275 = por %p273, %p274
      %p276 = scmp.le.s32.totalorder 1, %s28
      %p277 = scmp.lt.s32.totalorder %s28, 3
      %p278 = pnand %p276, %p277
      %p279 = pneg %p278
      // Predicated region
      $region9: #{tpu_custom_call.1} parent=5 // pred_check
        _
      $region10: #{tpu_custom_call.1} parent=5 // pred_check_branch
        %281 = sbr.rel (%p278) target = $region12
      $region11: #{tpu_custom_call.1} parent=5 // pred_region
        %s282 = ssub.s32 %s28, 1
        // Predicated region
        $region13: #{tpu_custom_call.1} parent=11 // pred_check
          %p283 = pneg %p153
        $region14: #{tpu_custom_call.1} parent=11 // pred_check_branch
          %285 = sbr.rel (%p283) target = $region16
        $region15: #{tpu_custom_call.1} parent=11 // pred_region
          _
        $region16: #{tpu_custom_call.1} parent=11 // pred_fallthru
          _
        // Predicated region
        $region17: #{tpu_custom_call.1} parent=11 // pred_check
          %p286 = pneg %p174
        $region18: #{tpu_custom_call.1} parent=11 // pred_check_branch
          %288 = sbr.rel (%p286) target = $region20
        $region19: #{tpu_custom_call.1} parent=11 // pred_region
          _
        $region20: #{tpu_custom_call.1} parent=11 // pred_fallthru
          _
        // Predicated region
        $region21: #{tpu_custom_call.1} parent=11 // pred_check
          %p289 = pneg %p195
        $region22: #{tpu_custom_call.1} parent=11 // pred_check_branch
          %291 = sbr.rel (%p289) target = $region24
        $region23: #{tpu_custom_call.1} parent=11 // pred_region
          _
        $region24: #{tpu_custom_call.1} parent=11 // pred_fallthru
          _
        // Predicated region
        $region25: #{tpu_custom_call.1} parent=11 // pred_check
          %p292 = pneg %p216
        $region26: #{tpu_custom_call.1} parent=11 // pred_check_branch
          %294 = sbr.rel (%p292) target = $region28
        $region27: #{tpu_custom_call.1} parent=11 // pred_region
          _
        $region28: #{tpu_custom_call.1} parent=11 // pred_fallthru
          _
      $region12: #{tpu_custom_call.1} parent=5 // pred_fallthru
        _
      %p295 = scmp.lt.s32.totalorder %s28, 2
      // Predicated region
      $region29: #{tpu_custom_call.1} parent=5 // pred_check
        %p296 = pneg %p295
      $region30: #{tpu_custom_call.1} parent=5 // pred_check_branch
        %298 = sbr.rel (%p296) target = $region32
      $region31: #{tpu_custom_call.1} parent=5 // pred_region
        // Predicated region
        $region33: #{tpu_custom_call.1} parent=31 // pred_check
          %p299 = pneg %p48
        $region34: #{tpu_custom_call.1} parent=31 // pred_check_branch
          %301 = sbr.rel (%p299) target = $region36
        $region35: #{tpu_custom_call.1} parent=31 // pred_region
          %s302 = sand.u32 %s38, 1
          %s303 = scalar_lea.sflag [#allocation3], %s302
          %s304 = sand.u32 %s38, 1
          %s305 = smul.addr %s304, 8
          %s306 = scalar_lea.vmem [#allocation2], %s305
          %s308 = ssub.s32 128, 128
          %309 = vsyncadd %s303, %s308
          %s310 = smul.addr %s28, 128
          %s311 = scalar_lea.hbm %s0, %s310
          %s313 = sshll.u32 %s306, 4
          %s314 = int_to_ptr.vmem [resolvable:$true] %s313
          %316 = dma.hbm_to_vmem [thread:$0]  %s311, 128, %s314, %s303
        $region36: #{tpu_custom_call.1} parent=31 // pred_fallthru
          _
        // Predicated region
        $region37: #{tpu_custom_call.1} parent=31 // pred_check
          %p317 = pneg %p74
        $region38: #{tpu_custom_call.1} parent=31 // pred_check_branch
          %319 = sbr.rel (%p317) target = $region40
        $region39: #{tpu_custom_call.1} parent=31 // pred_region
          %s320 = sand.u32 %s64, 1
          %s321 = scalar_lea.sflag [#allocation6], %s320
          %s322 = sand.u32 %s64, 1
          %s323 = smul.addr %s322, 8
          %s324 = scalar_lea.vmem [#allocation5], %s323
          %s326 = ssub.s32 128, 128
          %327 = vsyncadd %s321, %s326
          %s328 = smul.addr %s28, 128
          %s329 = scalar_lea.hbm %s1, %s328
          %s331 = sshll.u32 %s324, 4
          %s332 = int_to_ptr.vmem [resolvable:$true] %s331
          %334 = dma.hbm_to_vmem [thread:$0]  %s329, 128, %s332, %s321
        $region40: #{tpu_custom_call.1} parent=31 // pred_fallthru
          _
        // Predicated region
        $region41: #{tpu_custom_call.1} parent=31 // pred_check
          %p335 = pneg %p100
        $region42: #{tpu_custom_call.1} parent=31 // pred_check_branch
          %337 = sbr.rel (%p335) target = $region44
        $region43: #{tpu_custom_call.1} parent=31 // pred_region
          %p338 = scmp.lt.s32.totalorder %s28, 1
          %s339 = scalar_select %p338, %s28, 1
          %s340 = smul.addr %s339, 8
          %s341 = scalar_lea.vmem %s2, %s340
        $region44: #{tpu_custom_call.1} parent=31 // pred_fallthru
          _
        // Predicated region
        $region45: #{tpu_custom_call.1} parent=31 // pred_check
          %p342 = pneg %p126
        $region46: #{tpu_custom_call.1} parent=31 // pred_check_branch
          %344 = sbr.rel (%p342) target = $region48
        $region47: #{tpu_custom_call.1} parent=31 // pred_region
          %p345 = scmp.lt.s32.totalorder %s28, 1
          %s346 = scalar_select %p345, %s28, 1
          %s347 = scalar_lea.vmem %s3, %s346
        $region48: #{tpu_custom_call.1} parent=31 // pred_fallthru
          _
      $region32: #{tpu_custom_call.1} parent=5 // pred_fallthru
        _
      %p348 = scmp.le.s32.totalorder 1, %s28
      %p349 = scmp.lt.s32.totalorder %s28, 3
      %p350 = pnand %p348, %p349
      %p351 = pneg %p350
      // Predicated region
      $region49: #{tpu_custom_call.1} parent=5 // pred_check
        _
      $region50: #{tpu_custom_call.1} parent=5 // pred_check_branch
        %353 = sbr.rel (%p350) target = $region52
      $region51: #{tpu_custom_call.1} parent=5 // pred_region
        %s354 = ssub.s32 %s28, 1
        %s355 = sand.u32 %s41, 1
        %s356 = scalar_lea.sflag [#allocation3], %s355
        %s357 = sand.u32 %s41, 1
        %s358 = smul.addr %s357, 8
        %s359 = scalar_lea.vmem [#allocation2], %s358
        // Predicated region
        $region53: #{tpu_custom_call.1} parent=51 // pred_check
          %p360 = pneg %p54
        $region54: #{tpu_custom_call.1} parent=51 // pred_check_branch
          %362 = sbr.rel (%p360) target = $region56
        $region55: #{tpu_custom_call.1} parent=51 // pred_region
          %363 = dma.done %s356, 128
        $region56: #{tpu_custom_call.1} parent=51 // pred_fallthru
          _
        %s364 = sand.u32 %s67, 1
        %s365 = scalar_lea.sflag [#allocation6], %s364
        %s366 = sand.u32 %s67, 1
        %s367 = smul.addr %s366, 8
        %s368 = scalar_lea.vmem [#allocation5], %s367
        // Predicated region
        $region57: #{tpu_custom_call.1} parent=51 // pred_check
          %p369 = pneg %p80
        $region58: #{tpu_custom_call.1} parent=51 // pred_check_branch
          %371 = sbr.rel (%p369) target = $region60
        $region59: #{tpu_custom_call.1} parent=51 // pred_region
          %372 = dma.done %s365, 128
        $region60: #{tpu_custom_call.1} parent=51 // pred_fallthru
          _
        %s373 = sand.u32 %s41, 1
        %s374 = scalar_lea.sflag [#allocation3], %s373
        %s375 = sand.u32 %s41, 1
        %s376 = smul.addr %s375, 8
        %s377 = scalar_lea.vmem [#allocation2], %s376
        %p378 = pneg %p54
        %p379 = pneg %p51
        %s380 = sand.u32 %s67, 1
        %s381 = scalar_lea.sflag [#allocation6], %s380
        %s382 = sand.u32 %s67, 1
        %s383 = smul.addr %s382, 8
        %s384 = scalar_lea.vmem [#allocation5], %s383
        %p385 = pneg %p80
        %p386 = pneg %p77
        %p387 = scmp.lt.s32.totalorder %s33, 1
        %s388 = scalar_select %p387, %s33, 1
        %s389 = smul.addr %s388, 8
        %s390 = scalar_lea.vmem %s2, %s389
        %p391 = pneg %p106
        %p392 = pneg %p103
        %p393 = scmp.lt.s32.totalorder %s33, 1
        %s394 = scalar_select %p393, %s33, 1
        %s395 = scalar_lea.vmem %s3, %s394
        %p396 = pneg %p132
        %p397 = pneg %p129
        %p398 = pneg %p153
        %p399 = pneg %p150
        %p400 = pneg %p174
        %p401 = pneg %p171
        %p402 = pneg %p195
        %p403 = pneg %p192
        %p404 = pneg %p216
        %p405 = pneg %p213
        %p406 = pneg %p242
        %p407 = pneg %p239
        %s408 = sand.u32 %s229, 1
        %s409 = scalar_lea.sflag [#allocation4], %s408
        %s410 = sand.u32 %s229, 1
        %s411 = smul.addr %s410, 8
        %s412 = scalar_lea.vmem [#allocation7], %s411
        %p413 = pneg %p268
        %p414 = pneg %p265
        %s415 = sand.u32 %s255, 1
        %s416 = scalar_lea.sflag [#allocation9], %s415
        %s417 = sand.u32 %s255, 1
        %s418 = smul.addr %s417, 8
        %s419 = scalar_lea.vmem [#allocation8], %s418
        %p420 = scmp.lt.s32.totalorder %s33, 1
        %s421 = scalar_select %p420, %s33, 1
        %s422 = smul.addr %s421, 8
        %s423 = scalar_lea.vmem %s2, %s422
        %p424 = scmp.lt.s32.totalorder %s33, 1
        %s425 = scalar_select %p424, %s33, 1
        %s426 = scalar_lea.vmem %s3, %s425
        %v427 = vld [vmem:[%s359] sm:$0xff]
        %vm428 = vcmask 261120
        %v429 = vsel %vm428, %v427, 0.0
        %430 = vadd.xlane.f32.xlu0 %v429
        %v431 = vpop.xlane.xlu0 %430
        %v432 = vrcp.pop 32.0
        %v433 = vmul.f32 %v431, %v432
        %v434 = vsub.f32 %v427, %v433
        %v435 = vmul.f32 %v434, %v434
        %v436 = vsel %vm428, %v435, 0.0
        %437 = vadd.xlane.f32.xlu0 %v436
        %v438 = vpop.xlane.xlu0 %437
        %v439 = vrcp.pop 31.0
        %v440 = vmul.f32 %v438, %v439
        %v441 = vld [vmem:[%s6] sm:$0x1]
        %v443 = vlaneseq
        %v444 = vshrl.u32 %v443, 7
        %v445 = vsub.s32 0, %v444
        %v446 = vrot.slane %v441, %v445
        %v448 = vmul.f32 %v446, %v434
        %v449 = vrsqrt.pop %v440
        %v450 = vmul.f32 %v440, %v449
        %vm451 = vcmp.eq.f32.partialorder %v440, inf
        %v452 = vsel %vm451, %v440, %v450
        %vm453 = vcmp.eq.f32.partialorder %v440, 0.0
        %v454 = vand.u32 %v440, 2147483648
        %v455 = vsel %vm453, %v454, %v452
        %v456 = vadd.f32 %v455, 1e-06
        %v457 = vrcp.pop %v456
        %v458 = vmul.f32 %v448, %v457
        %v459 = vld [vmem:[%s7] sm:$0x1]
        %v461 = vlaneseq
        %v462 = vshrl.u32 %v461, 7
        %v463 = vsub.s32 0, %v462
        %v464 = vrot.slane %v459, %v463
        %v466 = vadd.f32 %v458, %v464
        %v467 = vld [vmem:[%s4] sm:$0xff]
        %v468 = vld [vmem:[%s4 + $0x8] sm:$0xff]
        %v469 = vld [vmem:[%s4 + $0x10] sm:$0xff]
        %v470 = vld [vmem:[%s4 + $0x18] sm:$0xff]
        %v471 = vld [vmem:[%s5] sm:$0x1]
        %v473 = vlaneseq
        %v474 = vshrl.u32 %v473, 7
        %v475 = vsub.s32 0, %v474
        %v476 = vrot.slane %v471, %v475
        %v479 = vsel %vm428, %v466, 0
        %481 = vmatprep.subr.mxu0 0.0
        %v482 = vand.u32 %v467, 4294901760
        %483 = vmatpush1.msra.mxu0 %v482
        %484 = vmatprep.subr.mxu0 0.0
        %v485 = vand.u32 %v468, 4294901760
        %486 = vmatpush1.msra.mxu0 %v485
        %487 = vmatprep.subr.mxu0 0.0
        %v488 = vand.u32 %v469, 4294901760
        %489 = vmatpush1.msra.mxu0 %v488
        %490 = vmatprep.subr.mxu0 0.0
        %v491 = vand.u32 %v470, 4294901760
        %492 = vmatpush1.msra.mxu0 %v491
        %493 = vmatprep.subr.mxu0 0.0
        %494 = vmatpush1.msra.mxu0 0.0
        %495 = vmatprep.subr.mxu0 0.0
        %496 = vmatpush1.msra.mxu0 0.0
        %497 = vmatprep.subr.mxu0 0.0
        %498 = vmatpush1.msra.mxu0 0.0
        %499 = vmatprep.subr.mxu0 0.0
        %500 = vmatpush1.msra.mxu0 0.0
        %501 = vmatprep.subr.mxu0 0.0
        %502 = vmatpush1.msra.mxu0 0.0
        %503 = vmatprep.subr.mxu0 0.0
        %504 = vmatpush1.msra.mxu0 0.0
        %505 = vmatprep.subr.mxu0 0.0
        %506 = vmatpush1.msra.mxu0 0.0
        %507 = vmatprep.subr.mxu0 0.0
        %508 = vmatpush1.msra.mxu0 0.0
        %509 = vmatprep.subr.mxu0 0.0
        %510 = vmatpush1.msra.mxu0 0.0
        %511 = vmatprep.subr.mxu0 0.0
        %512 = vmatpush1.msra.mxu0 0.0
        %513 = vmatprep.subr.mxu0 0.0
        %514 = vmatpush1.msra.mxu0 0.0
        %515 = vmatprep.subr.mxu0 0.0
        %516 = vmatpush1.msra.mxu0 0.0
        %517 = vmatprep.subr.mxu0 0.0
        %518 = vmatpush1.msra.mxu0 0.0
        %519 = vmatprep.subr.mxu0 0.0
        %520 = vmatpush1.msra.mxu0 0.0
        %521 = vmatprep.subr.mxu0 0.0
        %522 = vmatpush1.msra.mxu0 0.0
        %523 = vmatprep.subr.mxu0 0.0
        %524 = vmatpush1.msra.mxu0 0.0
        %525 = vmatprep.subr.mxu0 0.0
        %526 = vmatpush1.msra.mxu0 0.0
        %527 = vmatprep.subr.mxu0 0.0
        %528 = vmatpush1.msra.mxu0 0.0
        %529 = vmatprep.subr.mxu0 0.0
        %530 = vmatpush1.msra.mxu0 0.0
        %531 = vmatprep.subr.mxu0 0.0
        %532 = vmatpush1.msra.mxu0 0.0
        %533 = vmatprep.subr.mxu0 0.0
        %534 = vmatpush1.msra.mxu0 0.0
        %535 = vmatprep.subr.mxu0 0.0
        %536 = vmatpush1.msra.mxu0 0.0
        %537 = vmatprep.subr.mxu0 0.0
        %538 = vmatpush1.msra.mxu0 0.0
        %539 = vmatprep.subr.mxu0 0.0
        %540 = vmatpush1.msra.mxu0 0.0
        %541 = vmatprep.subr.mxu0 0.0
        %542 = vmatpush1.msra.mxu0 0.0
        %543 = vmatprep.subr.mxu0 0.0
        %544 = vmatpush1.msra.mxu0 0.0
        %545 = vmatprep.subr.mxu0 0.0
        %546 = vmatpush1.msra.mxu0 0.0
        %547 = vmatprep.subr.mxu0 0.0
        %548 = vmatpush1.msra.mxu0 0.0
        %549 = vmatprep.mubr.f32.mxu0 0.0
        %v550 = vand.u32 %v479, 4294901760
        %v551 = vsub.f32 %v479, %v550
        %v552 = vand.u32 %v551, 4294901760
        %v553 = vsub.f32 %v551, %v552
        %v554 = vand.u32 %v553, 4294901760
        %555 = vmatmul.mubr.f32.gmra.mrb[0].mxu0 %v554
        %v556 = vpop.f32.mrb[0].mxu0
        %v557 = vadd.f32 %v476, %v556
        %v558 = vpop.f32.mrb[0].mxu0
        %559 = vdwg.mxu0
        %560 = vmatprep.subr.mxu0 0.0
        %v561 = vand.u32 %v467, 4294901760
        %v562 = vsub.f32 %v467, %v561
        %v563 = vand.u32 %v562, 4294901760
        %v564 = vsub.f32 %v562, %v563
        %v565 = vand.u32 %v564, 4294901760
        %566 = vmatpush1.msra.mxu0 %v565
        %567 = vmatprep.subr.mxu0 0.0
        %v568 = vand.u32 %v468, 4294901760
        %v569 = vsub.f32 %v468, %v568
        %v570 = vand.u32 %v569, 4294901760
        %v571 = vsub.f32 %v569, %v570
        %v572 = vand.u32 %v571, 4294901760
        %573 = vmatpush1.msra.mxu0 %v572
        %574 = vmatprep.subr.mxu0 0.0
        %v575 = vand.u32 %v469, 4294901760
        %v576 = vsub.f32 %v469, %v575
        %v577 = vand.u32 %v576, 4294901760
        %v578 = vsub.f32 %v576, %v577
        %v579 = vand.u32 %v578, 4294901760
        %580 = vmatpush1.msra.mxu0 %v579
        %581 = vmatprep.subr.mxu0 0.0
        %v582 = vand.u32 %v470, 4294901760
        %v583 = vsub.f32 %v470, %v582
        %v584 = vand.u32 %v583, 4294901760
        %v585 = vsub.f32 %v583, %v584
        %v586 = vand.u32 %v585, 4294901760
        %587 = vmatpush1.msra.mxu0 %v586
        %588 = vmatprep.subr.mxu0 0.0
        %589 = vmatpush1.msra.mxu0 0.0
        %590 = vmatprep.subr.mxu0 0.0
        %591 = vmatpush1.msra.mxu0 0.0
        %592 = vmatprep.subr.mxu0 0.0
        %593 = vmatpush1.msra.mxu0 0.0
        %594 = vmatprep.subr.mxu0 0.0
        %595 = vmatpush1.msra.mxu0 0.0
        %596 = vmatprep.subr.mxu0 0.0
        %597 = vmatpush1.msra.mxu0 0.0
        %598 = vmatprep.subr.mxu0 0.0
        %599 = vmatpush1.msra.mxu0 0.0
        %600 = vmatprep.subr.mxu0 0.0
        %601 = vmatpush1.msra.mxu0 0.0
        %602 = vmatprep.subr.mxu0 0.0
        %603 = vmatpush1.msra.mxu0 0.0
        %604 = vmatprep.subr.mxu0 0.0
        %605 = vmatpush1.msra.mxu0 0.0
        %606 = vmatprep.subr.mxu0 0.0
        %607 = vmatpush1.msra.mxu0 0.0
        %608 = vmatprep.subr.mxu0 0.0
        %609 = vmatpush1.msra.mxu0 0.0
        %610 = vmatprep.subr.mxu0 0.0
        %611 = vmatpush1.msra.mxu0 0.0
        %612 = vmatprep.subr.mxu0 0.0
        %613 = vmatpush1.msra.mxu0 0.0
        %614 = vmatprep.subr.mxu0 0.0
        %615 = vmatpush1.msra.mxu0 0.0
        %616 = vmatprep.subr.mxu0 0.0
        %617 = vmatpush1.msra.mxu0 0.0
        %618 = vmatprep.subr.mxu0 0.0
        %619 = vmatpush1.msra.mxu0 0.0
        %620 = vmatprep.subr.mxu0 0.0
        %621 = vmatpush1.msra.mxu0 0.0
        %622 = vmatprep.subr.mxu0 0.0
        %623 = vmatpush1.msra.mxu0 0.0
        %624 = vmatprep.subr.mxu0 0.0
        %625 = vmatpush1.msra.mxu0 0.0
        %626 = vmatprep.subr.mxu0 0.0
        %627 = vmatpush1.msra.mxu0 0.0
        %628 = vmatprep.subr.mxu0 0.0
        %629 = vmatpush1.msra.mxu0 0.0
        %630 = vmatprep.subr.mxu0 0.0
        %631 = vmatpush1.msra.mxu0 0.0
        %632 = vmatprep.subr.mxu0 0.0
        %633 = vmatpush1.msra.mxu0 0.0
        %634 = vmatprep.subr.mxu0 0.0
        %635 = vmatpush1.msra.mxu0 0.0
        %636 = vmatprep.subr.mxu0 0.0
        %637 = vmatpush1.msra.mxu0 0.0
        %638 = vmatprep.subr.mxu0 0.0
        %639 = vmatpush1.msra.mxu0 0.0
        %640 = vmatprep.subr.mxu0 0.0
        %641 = vmatpush1.msra.mxu0 0.0
        %642 = vmatprep.subr.mxu0 0.0
        %643 = vmatpush1.msra.mxu0 0.0
        %644 = vmatprep.mubr.f32.mxu0 0.0
        %v645 = vand.u32 %v479, 4294901760
        %646 = vmatmul.mubr.f32.gmra.mrb[0].mxu0 %v645
        %v647 = vpop.f32.mrb[0].mxu0
        %v648 = vadd.f32 %v557, %v647
        %v649 = vpop.f32.mrb[0].mxu0
        %650 = vdwg.mxu0
        %651 = vmatprep.subr.mxu0 0.0
        %v652 = vand.u32 %v467, 4294901760
        %v653 = vsub.f32 %v467, %v652
        %654 = vmatpush1.msra.mxu0 %v653
        %655 = vmatprep.subr.mxu0 0.0
        %v656 = vand.u32 %v468, 4294901760
        %v657 = vsub.f32 %v468, %v656
        %658 = vmatpush1.msra.mxu0 %v657
        %659 = vmatprep.subr.mxu0 0.0
        %v660 = vand.u32 %v469, 4294901760
        %v661 = vsub.f32 %v469, %v660
        %662 = vmatpush1.msra.mxu0 %v661
        %663 = vmatprep.subr.mxu0 0.0
        %v664 = vand.u32 %v470, 4294901760
        %v665 = vsub.f32 %v470, %v664
        %666 = vmatpush1.msra.mxu0 %v665
        %667 = vmatprep.subr.mxu0 0.0
        %668 = vmatpush1.msra.mxu0 0.0
        %669 = vmatprep.subr.mxu0 0.0
        %670 = vmatpush1.msra.mxu0 0.0
        %671 = vmatprep.subr.mxu0 0.0
        %672 = vmatpush1.msra.mxu0 0.0
        %673 = vmatprep.subr.mxu0 0.0
        %674 = vmatpush1.msra.mxu0 0.0
        %675 = vmatprep.subr.mxu0 0.0
        %676 = vmatpush1.msra.mxu0 0.0
        %677 = vmatprep.subr.mxu0 0.0
        %678 = vmatpush1.msra.mxu0 0.0
        %679 = vmatprep.subr.mxu0 0.0
        %680 = vmatpush1.msra.mxu0 0.0
        %681 = vmatprep.subr.mxu0 0.0
        %682 = vmatpush1.msra.mxu0 0.0
        %683 = vmatprep.subr.mxu0 0.0
        %684 = vmatpush1.msra.mxu0 0.0
        %685 = vmatprep.subr.mxu0 0.0
        %686 = vmatpush1.msra.mxu0 0.0
        %687 = vmatprep.subr.mxu0 0.0
        %688 = vmatpush1.msra.mxu0 0.0
        %689 = vmatprep.subr.mxu0 0.0
        %690 = vmatpush1.msra.mxu0 0.0
        %691 = vmatprep.subr.mxu0 0.0
        %692 = vmatpush1.msra.mxu0 0.0
        %693 = vmatprep.subr.mxu0 0.0
        %694 = vmatpush1.msra.mxu0 0.0
        %695 = vmatprep.subr.mxu0 0.0
        %696 = vmatpush1.msra.mxu0 0.0
        %697 = vmatprep.subr.mxu0 0.0
        %698 = vmatpush1.msra.mxu0 0.0
        %699 = vmatprep.subr.mxu0 0.0
        %700 = vmatpush1.msra.mxu0 0.0
        %701 = vmatprep.subr.mxu0 0.0
        %702 = vmatpush1.msra.mxu0 0.0
        %703 = vmatprep.subr.mxu0 0.0
        %704 = vmatpush1.msra.mxu0 0.0
        %705 = vmatprep.subr.mxu0 0.0
        %706 = vmatpush1.msra.mxu0 0.0
        %707 = vmatprep.subr.mxu0 0.0
        %708 = vmatpush1.msra.mxu0 0.0
        %709 = vmatprep.subr.mxu0 0.0
        %710 = vmatpush1.msra.mxu0 0.0
        %711 = vmatprep.subr.mxu0 0.0
        %712 = vmatpush1.msra.mxu0 0.0
        %713 = vmatprep.subr.mxu0 0.0
        %714 = vmatpush1.msra.mxu0 0.0
        %715 = vmatprep.subr.mxu0 0.0
        %716 = vmatpush1.msra.mxu0 0.0
        %717 = vmatprep.subr.mxu0 0.0
        %718 = vmatpush1.msra.mxu0 0.0
        %719 = vmatprep.subr.mxu0 0.0
        %720 = vmatpush1.msra.mxu0 0.0
        %721 = vmatprep.subr.mxu0 0.0
        %722 = vmatpush1.msra.mxu0 0.0
        %723 = vmatprep.mubr.f32.mxu0 0.0
        %v724 = vand.u32 %v479, 4294901760
        %v725 = vsub.f32 %v479, %v724
        %726 = vmatmul.mubr.f32.gmra.mrb[0].mxu0 %v725
        %v727 = vpop.f32.mrb[0].mxu0
        %v728 = vadd.f32 %v648, %v727
        %v729 = vpop.f32.mrb[0].mxu0
        %730 = vdwg.mxu0
        %731 = vmatprep.subr.mxu0 0.0
        %v732 = vand.u32 %v467, 4294901760
        %733 = vmatpush1.msra.mxu0 %v732
        %734 = vmatprep.subr.mxu0 0.0
        %v735 = vand.u32 %v468, 4294901760
        %736 = vmatpush1.msra.mxu0 %v735
        %737 = vmatprep.subr.mxu0 0.0
        %v738 = vand.u32 %v469, 4294901760
        %739 = vmatpush1.msra.mxu0 %v738
        %740 = vmatprep.subr.mxu0 0.0
        %v741 = vand.u32 %v470, 4294901760
        %742 = vmatpush1.msra.mxu0 %v741
        %743 = vmatprep.subr.mxu0 0.0
        %744 = vmatpush1.msra.mxu0 0.0
        %745 = vmatprep.subr.mxu0 0.0
        %746 = vmatpush1.msra.mxu0 0.0
        %747 = vmatprep.subr.mxu0 0.0
        %748 = vmatpush1.msra.mxu0 0.0
        %749 = vmatprep.subr.mxu0 0.0
        %750 = vmatpush1.msra.mxu0 0.0
        %751 = vmatprep.subr.mxu0 0.0
        %752 = vmatpush1.msra.mxu0 0.0
        %753 = vmatprep.subr.mxu0 0.0
        %754 = vmatpush1.msra.mxu0 0.0
        %755 = vmatprep.subr.mxu0 0.0
        %756 = vmatpush1.msra.mxu0 0.0
        %757 = vmatprep.subr.mxu0 0.0
        %758 = vmatpush1.msra.mxu0 0.0
        %759 = vmatprep.subr.mxu0 0.0
        %760 = vmatpush1.msra.mxu0 0.0
        %761 = vmatprep.subr.mxu0 0.0
        %762 = vmatpush1.msra.mxu0 0.0
        %763 = vmatprep.subr.mxu0 0.0
        %764 = vmatpush1.msra.mxu0 0.0
        %765 = vmatprep.subr.mxu0 0.0
        %766 = vmatpush1.msra.mxu0 0.0
        %767 = vmatprep.subr.mxu0 0.0
        %768 = vmatpush1.msra.mxu0 0.0
        %769 = vmatprep.subr.mxu0 0.0
        %770 = vmatpush1.msra.mxu0 0.0
        %771 = vmatprep.subr.mxu0 0.0
        %772 = vmatpush1.msra.mxu0 0.0
        %773 = vmatprep.subr.mxu0 0.0
        %774 = vmatpush1.msra.mxu0 0.0
        %775 = vmatprep.subr.mxu0 0.0
        %776 = vmatpush1.msra.mxu0 0.0
        %777 = vmatprep.subr.mxu0 0.0
        %778 = vmatpush1.msra.mxu0 0.0
        %779 = vmatprep.subr.mxu0 0.0
        %780 = vmatpush1.msra.mxu0 0.0
        %781 = vmatprep.subr.mxu0 0.0
        %782 = vmatpush1.msra.mxu0 0.0
        %783 = vmatprep.subr.mxu0 0.0
        %784 = vmatpush1.msra.mxu0 0.0
        %785 = vmatprep.subr.mxu0 0.0
        %786 = vmatpush1.msra.mxu0 0.0
        %787 = vmatprep.subr.mxu0 0.0
        %788 = vmatpush1.msra.mxu0 0.0
        %789 = vmatprep.subr.mxu0 0.0
        %790 = vmatpush1.msra.mxu0 0.0
        %791 = vmatprep.subr.mxu0 0.0
        %792 = vmatpush1.msra.mxu0 0.0
        %793 = vmatprep.subr.mxu0 0.0
        %794 = vmatpush1.msra.mxu0 0.0
        %795 = vmatprep.subr.mxu0 0.0
        %796 = vmatpush1.msra.mxu0 0.0
        %797 = vmatprep.subr.mxu0 0.0
        %798 = vmatpush1.msra.mxu0 0.0
        %799 = vmatprep.mubr.f32.mxu0 0.0
        %v800 = vand.u32 %v479, 4294901760
        %v801 = vsub.f32 %v479, %v800
        %v802 = vand.u32 %v801, 4294901760
        %803 = vmatmul.mubr.f32.gmra.mrb[0].mxu0 %v802
        %v804 = vpop.f32.mrb[0].mxu0
        %v805 = vadd.f32 %v728, %v804
        %v806 = vpop.f32.mrb[0].mxu0
        %807 = vdwg.mxu0
        %808 = vmatprep.subr.mxu0 0.0
        %v809 = vand.u32 %v467, 4294901760
        %v810 = vsub.f32 %v467, %v809
        %v811 = vand.u32 %v810, 4294901760
        %812 = vmatpush1.msra.mxu0 %v811
        %813 = vmatprep.subr.mxu0 0.0
        %v814 = vand.u32 %v468, 4294901760
        %v815 = vsub.f32 %v468, %v814
        %v816 = vand.u32 %v815, 4294901760
        %817 = vmatpush1.msra.mxu0 %v816
        %818 = vmatprep.subr.mxu0 0.0
        %v819 = vand.u32 %v469, 4294901760
        %v820 = vsub.f32 %v469, %v819
        %v821 = vand.u32 %v820, 4294901760
        %822 = vmatpush1.msra.mxu0 %v821
        %823 = vmatprep.subr.mxu0 0.0
        %v824 = vand.u32 %v470, 4294901760
        %v825 = vsub.f32 %v470, %v824
        %v826 = vand.u32 %v825, 4294901760
        %827 = vmatpush1.msra.mxu0 %v826
        %828 = vmatprep.subr.mxu0 0.0
        %829 = vmatpush1.msra.mxu0 0.0
        %830 = vmatprep.subr.mxu0 0.0
        %831 = vmatpush1.msra.mxu0 0.0
        %832 = vmatprep.subr.mxu0 0.0
        %833 = vmatpush1.msra.mxu0 0.0
        %834 = vmatprep.subr.mxu0 0.0
        %835 = vmatpush1.msra.mxu0 0.0
        %836 = vmatprep.subr.mxu0 0.0
        %837 = vmatpush1.msra.mxu0 0.0
        %838 = vmatprep.subr.mxu0 0.0
        %839 = vmatpush1.msra.mxu0 0.0
        %840 = vmatprep.subr.mxu0 0.0
        %841 = vmatpush1.msra.mxu0 0.0
        %842 = vmatprep.subr.mxu0 0.0
        %843 = vmatpush1.msra.mxu0 0.0
        %844 = vmatprep.subr.mxu0 0.0
        %845 = vmatpush1.msra.mxu0 0.0
        %846 = vmatprep.subr.mxu0 0.0
        %847 = vmatpush1.msra.mxu0 0.0
        %848 = vmatprep.subr.mxu0 0.0
        %849 = vmatpush1.msra.mxu0 0.0
        %850 = vmatprep.subr.mxu0 0.0
        %851 = vmatpush1.msra.mxu0 0.0
        %852 = vmatprep.subr.mxu0 0.0
        %853 = vmatpush1.msra.mxu0 0.0
        %854 = vmatprep.subr.mxu0 0.0
        %855 = vmatpush1.msra.mxu0 0.0
        %856 = vmatprep.subr.mxu0 0.0
        %857 = vmatpush1.msra.mxu0 0.0
        %858 = vmatprep.subr.mxu0 0.0
        %859 = vmatpush1.msra.mxu0 0.0
        %860 = vmatprep.subr.mxu0 0.0
        %861 = vmatpush1.msra.mxu0 0.0
        %862 = vmatprep.subr.mxu0 0.0
        %863 = vmatpush1.msra.mxu0 0.0
        %864 = vmatprep.subr.mxu0 0.0
        %865 = vmatpush1.msra.mxu0 0.0
        %866 = vmatprep.subr.mxu0 0.0
        %867 = vmatpush1.msra.mxu0 0.0
        %868 = vmatprep.subr.mxu0 0.0
        %869 = vmatpush1.msra.mxu0 0.0
        %870 = vmatprep.subr.mxu0 0.0
        %871 = vmatpush1.msra.mxu0 0.0
        %872 = vmatprep.subr.mxu0 0.0
        %873 = vmatpush1.msra.mxu0 0.0
        %874 = vmatprep.subr.mxu0 0.0
        %875 = vmatpush1.msra.mxu0 0.0
        %876 = vmatprep.subr.mxu0 0.0
        %877 = vmatpush1.msra.mxu0 0.0
        %878 = vmatprep.subr.mxu0 0.0
        %879 = vmatpush1.msra.mxu0 0.0
        %880 = vmatprep.subr.mxu0 0.0
        %881 = vmatpush1.msra.mxu0 0.0
        %882 = vmatprep.subr.mxu0 0.0
        %883 = vmatpush1.msra.mxu0 0.0
        %884 = vmatprep.mubr.f32.mxu0 0.0
        %v885 = vand.u32 %v479, 4294901760
        %886 = vmatmul.mubr.f32.gmra.mrb[0].mxu0 %v885
        %v887 = vpop.f32.mrb[0].mxu0
        %v888 = vadd.f32 %v805, %v887
        %v889 = vpop.f32.mrb[0].mxu0
        %890 = vdwg.mxu0
        %891 = vmatprep.subr.mxu0 0.0
        %v892 = vand.u32 %v467, 4294901760
        %893 = vmatpush1.msra.mxu0 %v892
        %894 = vmatprep.subr.mxu0 0.0
        %v895 = vand.u32 %v468, 4294901760
        %896 = vmatpush1.msra.mxu0 %v895
        %897 = vmatprep.subr.mxu0 0.0
        %v898 = vand.u32 %v469, 4294901760
        %899 = vmatpush1.msra.mxu0 %v898
        %900 = vmatprep.subr.mxu0 0.0
        %v901 = vand.u32 %v470, 4294901760
        %902 = vmatpush1.msra.mxu0 %v901
        %903 = vmatprep.subr.mxu0 0.0
        %904 = vmatpush1.msra.mxu0 0.0
        %905 = vmatprep.subr.mxu0 0.0
        %906 = vmatpush1.msra.mxu0 0.0
        %907 = vmatprep.subr.mxu0 0.0
        %908 = vmatpush1.msra.mxu0 0.0
        %909 = vmatprep.subr.mxu0 0.0
        %910 = vmatpush1.msra.mxu0 0.0
        %911 = vmatprep.subr.mxu0 0.0
        %912 = vmatpush1.msra.mxu0 0.0
        %913 = vmatprep.subr.mxu0 0.0
        %914 = vmatpush1.msra.mxu0 0.0
        %915 = vmatprep.subr.mxu0 0.0
        %916 = vmatpush1.msra.mxu0 0.0
        %917 = vmatprep.subr.mxu0 0.0
        %918 = vmatpush1.msra.mxu0 0.0
        %919 = vmatprep.subr.mxu0 0.0
        %920 = vmatpush1.msra.mxu0 0.0
        %921 = vmatprep.subr.mxu0 0.0
        %922 = vmatpush1.msra.mxu0 0.0
        %923 = vmatprep.subr.mxu0 0.0
        %924 = vmatpush1.msra.mxu0 0.0
        %925 = vmatprep.subr.mxu0 0.0
        %926 = vmatpush1.msra.mxu0 0.0
        %927 = vmatprep.subr.mxu0 0.0
        %928 = vmatpush1.msra.mxu0 0.0
        %929 = vmatprep.subr.mxu0 0.0
        %930 = vmatpush1.msra.mxu0 0.0
        %931 = vmatprep.subr.mxu0 0.0
        %932 = vmatpush1.msra.mxu0 0.0
        %933 = vmatprep.subr.mxu0 0.0
        %934 = vmatpush1.msra.mxu0 0.0
        %935 = vmatprep.subr.mxu0 0.0
        %936 = vmatpush1.msra.mxu0 0.0
        %937 = vmatprep.subr.mxu0 0.0
        %938 = vmatpush1.msra.mxu0 0.0
        %939 = vmatprep.subr.mxu0 0.0
        %940 = vmatpush1.msra.mxu0 0.0
        %941 = vmatprep.subr.mxu0 0.0
        %942 = vmatpush1.msra.mxu0 0.0
        %943 = vmatprep.subr.mxu0 0.0
        %944 = vmatpush1.msra.mxu0 0.0
        %945 = vmatprep.subr.mxu0 0.0
        %946 = vmatpush1.msra.mxu0 0.0
        %947 = vmatprep.subr.mxu0 0.0
        %948 = vmatpush1.msra.mxu0 0.0
        %949 = vmatprep.subr.mxu0 0.0
        %950 = vmatpush1.msra.mxu0 0.0
        %951 = vmatprep.subr.mxu0 0.0
        %952 = vmatpush1.msra.mxu0 0.0
        %953 = vmatprep.subr.mxu0 0.0
        %954 = vmatpush1.msra.mxu0 0.0
        %955 = vmatprep.subr.mxu0 0.0
        %956 = vmatpush1.msra.mxu0 0.0
        %957 = vmatprep.subr.mxu0 0.0
        %958 = vmatpush1.msra.mxu0 0.0
        %959 = vmatprep.mubr.f32.mxu0 0.0
        %v960 = vand.u32 %v479, 4294901760
        %961 = vmatmul.mubr.f32.gmra.mrb[0].mxu0 %v960
        %v962 = vpop.f32.mrb[0].mxu0
        %v963 = vadd.f32 %v888, %v962
        %v964 = vpop.f32.mrb[0].mxu0
        %965 = vdwg.mxu0
        %967 = vrot.lane.b32.xlu0 %v963, 96
        %v968 = vpop.permute.xlu0 %967
        %v970 = vrot.slane %v968, 7
        %v971 = vrot.slane %v968, 1
        %v972 = vmul.f32 %v963, %v971
        %v973 = vsel %vm428, %v972, 0.0
        %974 = vadd.xlane.f32.xlu0 %v973
        %v975 = vpop.xlane.xlu0 %974
        %v976 = vmul.f32 %v975, 0.00390625
        %v977 = vmul.f32 %v963, %v970
        %v978 = vsel %vm428, %v977, 0.0
        %979 = vadd.xlane.f32.xlu0 %v978
        %v980 = vpop.xlane.xlu0 %979
        %v981 = vmul.f32 %v980, 0.00390625
        %v982 = vld [vmem:[%s423] sm:$0xff]
        %vm983 = vcmp.gt.f32.partialorder %v982, 0.5
        %v984 = vsel %vm983, %v976, -1e+09
        %v985 = vsel %vm983, %v981, -1e+09
        %987 = vrot.lane.b32.xlu0 %v985, 127
        %v988 = vpop.permute.xlu0 %987
        %v990 = vmax.f32 %v984, %v988
        %v991 = vsub.f32 %v984, %v990
        %v992 = vmul.f32 %v991, 1.442695
        %v993 = vpow.pop %v992
        %v994 = vsel %vm983, %v993, 0.0
        %996 = vrot.lane.b32.xlu0 %v990, 1
        %v997 = vpop.permute.xlu0 %996
        %v999 = vsub.f32 %v985, %v997
        %v1000 = vmul.f32 %v999, 1.442695
        %v1001 = vpow.pop %v1000
        %v1002 = vsel %vm983, %v1001, 0.0
        %1004 = vrot.lane.b32.xlu0 %v1002, 127
        %v1005 = vpop.permute.xlu0 %1004
        %v1007 = vadd.f32 %v994, %v1005
        %1009 = vrot.lane.b32.xlu0 %v1007, 2
        %v1010 = vpop.permute.xlu0 %1009
        %v1012 = vsel %vm983, 1.0, %v1010
        %1014 = vrot.lane.b32.xlu0 %v1012, 126
        %v1015 = vpop.permute.xlu0 %1014
        %v1017 = vrcp.pop %v1015
        %v1018 = vmul.f32 %v994, %v1017
        %1020 = vrot.lane.b32.xlu0 %v1018, 2
        %v1021 = vpop.permute.xlu0 %1020
        %v1023 = vsel %vm983, 0.125, %v1021
        %1024 = vrot.lane.b32.xlu0 %v1012, 127
        %v1025 = vpop.permute.xlu0 %1024
        %v1027 = vrcp.pop %v1025
        %v1028 = vmul.f32 %v1002, %v1027
        %1030 = vrot.lane.b32.xlu0 %v1028, 1
        %v1031 = vpop.permute.xlu0 %1030
        %v1033 = vsel %vm983, 0.125, %v1031
        %1035 = vrot.lane.b32.xlu0 %v1033, 126
        %v1036 = vpop.permute.xlu0 %1035
        %v1038 = vrot.slane %v1036, 1
        %1040 = vrot.lane.b32.xlu0 %v1023, 126
        %v1041 = vpop.permute.xlu0 %1040
        %v1043 = vrot.slane %v1041, 7
        %1045 = vrot.lane.b32.xlu0 %v1038, 2
        %v1046 = vpop.permute.xlu0 %1045
        %v1048 = vmul.f32 %v1023, %v1046
        %v1049 = vadd.f32 %v1048, 1e-09
        %v1050 = vrsqrt.pop %v1049
        %v1051 = vmul.f32 %v1049, %v1050
        %vm1052 = vcmp.eq.f32.partialorder %v1049, inf
        %v1053 = vsel %vm1052, %v1049, %v1051
        %vm1054 = vcmp.eq.f32.partialorder %v1049, 0.0
        %v1055 = vand.u32 %v1049, 2147483648
        %v1056 = vsel %vm1054, %v1055, %v1053
        %1058 = vrot.lane.b32.xlu0 %v1043, 2
        %v1059 = vpop.permute.xlu0 %1058
        %v1061 = vmul.f32 %v1033, %v1059
        %v1062 = vadd.f32 %v1061, 1e-09
        %v1063 = vrsqrt.pop %v1062
        %v1064 = vmul.f32 %v1062, %v1063
        %vm1065 = vcmp.eq.f32.partialorder %v1062, inf
        %v1066 = vsel %vm1065, %v1062, %v1064
        %vm1067 = vcmp.eq.f32.partialorder %v1062, 0.0
        %v1068 = vand.u32 %v1062, 2147483648
        %v1069 = vsel %vm1067, %v1068, %v1066
        %v1070 = vlaneseq
        %v1071 = vshrl.u32 %v1070, 7
        %v1072 = vlaneseq
        %v1073 = vand.u32 %v1072, 127
        %vm1074 = vcmp.eq.s32.totalorder %v1071, %v1073
        %v1075 = vadd.s32 %v1071, 1
        %vm1076 = vcmp.eq.s32.totalorder %v1073, %v1075
        %v1077 = vadd.s32 %v1073, 1
        %vm1078 = vcmp.eq.s32.totalorder %v1077, %v1071
        %v1079 = vld [vmem:[%s426] sm:$0x1]
        %vm1080 = vcmp.gt.f32.partialorder %v1079, 0.5
        %v1081 = vsel %vm983, 1, 0
        %1082 = vset.pattern.permute.xlu0 2
        %1083 = vperm.xlu0 %1082, %v1081
        %v1084 = vpop.permute.xlu0 %1083
        %vm1085 = vcmp.eq.s32.totalorder %v1084, 1
        %v1086 = vsel %vm1080, 1, 0
        %v1087 = vlaneseq
        %v1088 = vshrl.u32 %v1087, 7
        %v1089 = vsub.s32 0, %v1088
        %v1090 = vrot.slane %v1086, %v1089
        %vm1091 = vcmp.eq.s32.totalorder %v1090, 1
        %vm1092 = vmand %vm1085, %vm1091
        %v1093 = vsel %vm1092, 0.125, 3.1622778e-05
        %1095 = vset.pattern.permute.xlu0 2
        %1096 = vperm.xlu0 %1095, %v1069
        %v1097 = vpop.permute.xlu0 %1096
        %v1099 = vsel %vm1078, %v1097, %v1093
        %1101 = vset.pattern.permute.xlu0 2
        %1102 = vperm.xlu0 %1101, %v1056
        %v1103 = vpop.permute.xlu0 %1102
        %v1105 = vsel %vm1076, %v1103, %v1099
        %v1106 = vld [vmem:[%s368] sm:$0xff]
        %v1107 = vsub.f32 1.0, %v1106
        %v1108 = vmul.f32 %v1107, %v1105
        %v1109 = vadd.f32 %v1106, %v1108
        %vm1110 = vcmask 64512
        %1111 = vst.msk [vmem:[%s419] sm:$0xff] %vm1110, %v1109
        %v1112 = vsub.f32 1.0, %v982
        %1113 = vrot.lane.b32.xlu0 %v1056, 1
        %v1114 = vpop.permute.xlu0 %1113
        %v1116 = vmul.f32 %v1112, %v1114
        %v1117 = vadd.f32 %v982, %v1116
        %v1118 = vadd.f32 %v1117, 1e-09
        %v1119 = vlog2.pop %v1118
        %v1120 = vmul.f32 %v1119, 0.6931472
        %vm1121 = vcmp.lt.s32.totalorder %v1071, %v1073
        %1123 = vset.pattern.permute.xlu0 3
        %1124 = vperm.xlu0 %1123, %v1120
        %v1125 = vpop.permute.xlu0 %1124
        %v1127 = vsel %vm1121, %v1125, 0.0
        %v1128 = vsel %vm1110, %v1127, 0.0
        %v1129 = vrot.slane %v1128, 4
        %v1130 = vadd.f32 %v1128, %v1129
        %v1131 = vrot.slane %v1130, 2
        %v1132 = vadd.f32 %v1130, %v1131
        %v1133 = vrot.slane %v1132, 1
        %v1134 = vadd.f32 %v1132, %v1133
        %v1135 = vsel %vm1074, %v1134, 0.0
        %v1136 = vsel %vm1110, %v1135, 0.0
        %1137 = vadd.xlane.f32.xlu0 %v1136
        %v1138 = vpop.xlane.xlu0 %1137
        %vm1139 = vcmp.gt.s32.totalorder %v1073, %v1071
        %v1140 = vsub.f32 %v1134, %v1138
        %v1141 = vsub.f32 %v1138, %v1134
        %v1142 = vsel %vm1139, %v1140, %v1141
        %v1143 = vmul.f32 %v1142, 1.442695
        %v1144 = vpow.pop %v1143
        %v1145 = vadd.f32 %v1144, 1e-09
        %v1146 = vsel %vm1074, %v1109, %v1145
        %1147 = vst.msk [vmem:[%s412] sm:$0xff] %vm1110, %v1146
        %s1148 = sand.u32 %s229, 1
        %s1149 = scalar_lea.sflag [#allocation4], %s1148
        %s1150 = sand.u32 %s229, 1
        %s1151 = smul.addr %s1150, 8
        %s1152 = scalar_lea.vmem [#allocation7], %s1151
        %s1153 = sand.u32 %s255, 1
        %s1154 = scalar_lea.sflag [#allocation9], %s1153
        %s1155 = sand.u32 %s255, 1
        %s1156 = smul.addr %s1155, 8
        %s1157 = scalar_lea.vmem [#allocation8], %s1156
        // Predicated region
        $region61: #{tpu_custom_call.1} parent=51 // pred_check
          %p1158 = pneg %p239
        $region62: #{tpu_custom_call.1} parent=51 // pred_check_branch
          %1160 = sbr.rel (%p1158) target = $region64
        $region63: #{tpu_custom_call.1} parent=51 // pred_region
          %s1162 = ssub.s32 128, 128
          %1163 = vsyncadd %s1149, %s1162
          %s1164 = smul.addr %s33, 128
          %s1165 = scalar_lea.hbm %s8, %s1164
          %s1167 = sshll.u32 %s1152, 4
          %s1168 = int_to_ptr.vmem [resolvable:$true] %s1167
          %1170 = dma.vmem_to_hbm [thread:$0]  %s1168, 128, %s1165, %s1149
        $region64: #{tpu_custom_call.1} parent=51 // pred_fallthru
          _
        // Predicated region
        $region65: #{tpu_custom_call.1} parent=51 // pred_check
          %p1171 = pneg %p265
        $region66: #{tpu_custom_call.1} parent=51 // pred_check_branch
          %1173 = sbr.rel (%p1171) target = $region68
        $region67: #{tpu_custom_call.1} parent=51 // pred_region
          %s1175 = ssub.s32 128, 128
          %1176 = vsyncadd %s1154, %s1175
          %s1177 = smul.addr %s33, 128
          %s1178 = scalar_lea.hbm %s9, %s1177
          %s1180 = sshll.u32 %s1157, 4
          %s1181 = int_to_ptr.vmem [resolvable:$true] %s1180
          %1183 = dma.vmem_to_hbm [thread:$0]  %s1181, 128, %s1178, %s1154
        $region68: #{tpu_custom_call.1} parent=51 // pred_fallthru
          _
      $region52: #{tpu_custom_call.1} parent=5 // pred_fallthru
        _
      %p1184 = scmp.le.s32.totalorder 2, %s28
      // Predicated region
      $region69: #{tpu_custom_call.1} parent=5 // pred_check
        %p1185 = pneg %p1184
      $region70: #{tpu_custom_call.1} parent=5 // pred_check_branch
        %1187 = sbr.rel (%p1185) target = $region72
      $region71: #{tpu_custom_call.1} parent=5 // pred_region
        %s1188 = ssub.s32 %s28, 2
        // Predicated region
        $region73: #{tpu_custom_call.1} parent=71 // pred_check
          %p1189 = pneg %p245
        $region74: #{tpu_custom_call.1} parent=71 // pred_check_branch
          %1191 = sbr.rel (%p1189) target = $region76
        $region75: #{tpu_custom_call.1} parent=71 // pred_region
          %s1192 = sand.u32 %s230, 1
          %s1193 = scalar_lea.sflag [#allocation4], %s1192
          %s1194 = sand.u32 %s230, 1
          %s1195 = smul.addr %s1194, 8
          %s1196 = scalar_lea.vmem [#allocation7], %s1195
          %1197 = dma.done %s1193, 128
        $region76: #{tpu_custom_call.1} parent=71 // pred_fallthru
          _
        // Predicated region
        $region77: #{tpu_custom_call.1} parent=71 // pred_check
          %p1198 = pneg %p271
        $region78: #{tpu_custom_call.1} parent=71 // pred_check_branch
          %1200 = sbr.rel (%p1198) target = $region80
        $region79: #{tpu_custom_call.1} parent=71 // pred_region
          %s1201 = sand.u32 %s256, 1
          %s1202 = scalar_lea.sflag [#allocation9], %s1201
          %s1203 = sand.u32 %s256, 1
          %s1204 = smul.addr %s1203, 8
          %s1205 = scalar_lea.vmem [#allocation8], %s1204
          %1206 = dma.done %s1202, 128
        $region80: #{tpu_custom_call.1} parent=71 // pred_fallthru
          _
      $region72: #{tpu_custom_call.1} parent=5 // pred_fallthru
        _
    $region6: #{tpu_custom_call.1} parent=1 // loop_footer
      %s32 = sadd.s32 1, %s28
    $region7: #{tpu_custom_call.1} parent=1 // loop_footer_branch
      %27 = sbr.rel target = $region3
    $region8: #{tpu_custom_call.1} parent=1 // loop_exit
      _
    %1207 = vsyncpa [#allocation3], 1
    %s1208 = scalar_lea.sflag [#allocation3], 1
    %1209 = vsyncpa %s1208, 1
    %1210 = vsyncpa [#allocation6], 1
    %s1211 = scalar_lea.sflag [#allocation6], 1
    %1212 = vsyncpa %s1211, 1
    %1213 = vsyncpa [#allocation4], 1
    %s1214 = scalar_lea.sflag [#allocation4], 1
    %1215 = vsyncpa %s1214, 1
    %1216 = vsyncpa [#allocation9], 1
    %s1217 = scalar_lea.sflag [#allocation9], 1
    %1218 = vsyncpa %s1217, 1

</llo_original>
